<compile_context>
chip_gen: v5e
topology: v5e:2x2
jax: 0.10.0
libtpu: 0.0.40
codegen_flags: <defaults>
</compile_context>

<pallas_src>
import functools

import jax
import jax.numpy as jnp
from jax import lax
from jax.experimental import pallas as pl
from jax.experimental.pallas import tpu as pltpu


def _basic_block_kernel(x_ref, w1_ref, w2_ref, bn_ref, out_ref, pad_ref,
                        *, Nb, H, WC):
    """Nb images per grid step, lane-dense (row, W*C) layout.

    x_ref   : (Nb, H, WC)     f32   lane-dense input rows (also the residual)
    w1/w2   : (3, WC, WC)     bf16  no-pad W-lifted conv weights, one per ky tap
    bn_ref  : (4, WC)         f32   rows = [s1, b1, s2, b2] folded BN params
    out_ref : (Nb, H, WC)     f32
    pad_ref : (Nb*(H+2), WC)  bf16  scratch: images stacked with one zero row
                                    above/below each image (H halo only; the
                                    W halo is folded into the lifted weights).
    """
    SI = H + 2                      # per-image row stride inside the slab
    Mtot = Nb * SI - 2              # matmul M: valid rows + inter-image gaps

    # --- build the H-padded slab from the resident x block (full-lane) ------
    # Rebuilt every step, so scratch state never leaks across grid steps
    # (safe if the batch-chunk axis is sharded across TensorCores).
    pad_ref[...] = jnp.zeros_like(pad_ref)
    for n in range(Nb):
        base = n * SI
        pad_ref[base + 1:base + 1 + H, :] = x_ref[n].astype(pad_ref.dtype)

    def conv(w_ref):
        # Three accumulating (Mtot, WC) x (WC, WC) bf16 matmuls whose LHS is
        # read straight from the padded slab (no LHS copy), f32 accumulation.
        acc = jnp.dot(pad_ref[0:Mtot, :], w_ref[0],
                      preferred_element_type=jnp.float32)
        acc += jnp.dot(pad_ref[1:1 + Mtot, :], w_ref[1],
                       preferred_element_type=jnp.float32)
        acc += jnp.dot(pad_ref[2:2 + Mtot, :], w_ref[2],
                       preferred_element_type=jnp.float32)
        return acc

    # slab rows that correspond to real image rows (gap rows are discarded)
    row = lax.broadcasted_iota(jnp.int32, (Mtot, 1), 0)
    valid = (row % SI) < H

    # ---- conv1 -> bn1 -> relu (f32 elementwise) ----
    h1 = jnp.maximum(conv(w1_ref) * bn_ref[0:1, :] + bn_ref[1:2, :], 0.0)

    # Write h1 back into the slab for conv2.  Masking the inter-image gap rows
    # to zero keeps every halo row of the slab exactly zero.
    pad_ref[1:1 + Mtot, :] = jnp.where(valid, h1, 0.0).astype(pad_ref.dtype)

    # ---- conv2 -> bn2 ----
    h2 = conv(w2_ref) * bn_ref[2:3, :] + bn_ref[3:4, :]

    # ---- residual add (from the resident x block) + relu, dense store ----
    for n in range(Nb):
        base = n * SI
        y = jnp.maximum(h2[base:base + H, :] + x_ref[n], 0.0)
        out_ref[n] = y.astype(out_ref.dtype)


def _lift_conv3x3_nopad(w, W):
    """PyTorch (Cout, Cin, 3, 3) conv weight -> (3, W*Cin, W*Cout) bf16.

    Lifted over the UNPADDED W axis: for vertical tap ky,
      lifted[ky, wi*Cin+ci, wo*Cout+co] = w[co, ci, ky, wi-wo+1]
    when wi-wo+1 in {0,1,2} (boundary taps simply absent), so that multiplying
    the lane-dense image row h+ky-1 by lifted[ky] and summing over ky
    reproduces the 3x3 conv with padding 1.  K per tap = W*Cin (lane-aligned).

    TODO(synk): at real channel counts (C >= 64) switch to im2col
    (K = 9*Cin, N = Cout); the W-lift is O(W^2*Cin*Cout) and only pays off
    when W*C is needed to reach 128 lanes (tiny C).
    """
    Cout, Cin, _, _ = w.shape
    wt = jnp.transpose(w, (2, 3, 1, 0))                      # (ky, kx, Cin, Cout)
    # sel[kx, wi, wo] = 1 iff wi == wo + kx - 1
    sel = jnp.stack([jnp.eye(W, W, k=1 - kx, dtype=w.dtype) for kx in range(3)])
    lifted = jnp.einsum("yxio,xpw->ypiwo", wt, sel)          # (3, W, Cin, W, Cout)
    return lifted.reshape(3, W * Cin, W * Cout).astype(jnp.bfloat16)


def basic_block_pallas(x_nchw, params, eps=1e-5, images_per_step=8):
    """x_nchw: (N, C, H, W) float32. Returns (N, C, H, W).

    images_per_step=8 gives matmul M = 8*(H+2)-2 = 142 >= 128 (fills the v5e
    MXU); use 16 on v6e/v7x when the batch is large enough to still leave
    several grid steps per TensorCore.
    """
    x = jnp.transpose(x_nchw, (0, 2, 3, 1))                  # NHWC
    N, H, W, Cin = x.shape
    Cout = params["conv1_w"].shape[0]
    assert Cin == Cout, "identity path requires inplanes == planes (no downsample)"
    C = Cout
    WC = W * C
    assert WC % 128 == 0, "lane-dense layout needs W*C to be a multiple of 128"

    Nb = images_per_step
    G = -(-N // Nb)                                          # ceil-div
    Npad = G * Nb
    x_ld = x.reshape(N, H, WC)                               # lane-dense input
    if Npad != N:
        x_ld = jnp.concatenate(
            [x_ld, jnp.zeros((Npad - N, H, WC), x_ld.dtype)], axis=0)

    w1 = _lift_conv3x3_nopad(params["conv1_w"], W)           # (3, WC, WC) bf16
    w2 = _lift_conv3x3_nopad(params["conv2_w"], W)

    # Fold eval-mode BatchNorm into per-channel scale/bias, tiled to the
    # lane-dense W*C layout, and merged into one (4, WC) stream.
    def fold_bn(g, b, m, v):
        s = g / jnp.sqrt(v + eps)
        return jnp.tile(s, W), jnp.tile(b - m * s, W)

    s1, b1 = fold_bn(params["bn1_g"], params["bn1_b"],
                     params["bn1_m"], params["bn1_v"])
    s2, b2 = fold_bn(params["bn2_g"], params["bn2_b"],
                     params["bn2_m"], params["bn2_v"])
    bn = jnp.stack([s1, b1, s2, b2]).astype(jnp.float32)     # (4, WC)

    kernel = functools.partial(_basic_block_kernel, Nb=Nb, H=H, WC=WC)

    out_ld = pl.pallas_call(
        kernel,
        out_shape=jax.ShapeDtypeStruct((Npad, H, WC), x_ld.dtype),
        grid_spec=pltpu.PrefetchScalarGridSpec(
            num_scalar_prefetch=0,
            grid=(G,),
            in_specs=[
                pl.BlockSpec((Nb, H, WC), lambda g: (g, 0, 0)),
                pl.BlockSpec((3, WC, WC), lambda g: (0, 0, 0)),
                pl.BlockSpec((3, WC, WC), lambda g: (0, 0, 0)),
                pl.BlockSpec((4, WC), lambda g: (0, 0)),
            ],
            out_specs=pl.BlockSpec((Nb, H, WC), lambda g: (g, 0, 0)),
            scratch_shapes=[
                pltpu.VMEM((Nb * (H + 2), WC), jnp.bfloat16),  # padded slab
            ],
        ),
        compiler_params=pltpu.CompilerParams(
            dimension_semantics=("parallel",),
            vmem_limit_bytes=32 * 1024 * 1024,
        ),
    )(x_ld, w1, w2, bn)

    out = out_ld[:N].reshape(N, H, W, Cout)
    return jnp.transpose(out, (0, 3, 1, 2))                  # back to NCHW


def basic_block_reference(x_nchw, params, eps=1e-5):
    """Plain-JAX NCHW f32 reference for correctness checking."""
    def conv3x3(x, w):
        return lax.conv_general_dilated(
            x, w, window_strides=(1, 1), padding=((1, 1), (1, 1)),
            dimension_numbers=("NCHW", "OIHW", "NCHW"))

    def bn(x, g, b, m, v):
        g, b, m, v = (a.reshape(1, -1, 1, 1) for a in (g, b, m, v))
        return (x - m) / jnp.sqrt(v + eps) * g + b

    out = conv3x3(x_nchw, params["conv1_w"])
    out = jnp.maximum(bn(out, params["bn1_g"], params["bn1_b"],
                         params["bn1_m"], params["bn1_v"]), 0.0)
    out = conv3x3(out, params["conv2_w"])
    out = bn(out, params["bn2_g"], params["bn2_b"],
             params["bn2_m"], params["bn2_v"])
    return jnp.maximum(out + x_nchw, 0.0)


def make_params(key, inplanes, planes):
    ks = jax.random.split(key, 8)
    return {
        "conv1_w": jax.random.normal(ks[0], (planes, inplanes, 3, 3),
                                     jnp.float32) * 0.1,
        "conv2_w": jax.random.normal(ks[1], (planes, planes, 3, 3),
                                     jnp.float32) * 0.1,
        "bn1_g": 1.0 + 0.1 * jax.random.normal(ks[2], (planes,), jnp.float32),
        "bn1_b": 0.1 * jax.random.normal(ks[3], (planes,), jnp.float32),
        "bn1_m": 0.1 * jax.random.normal(ks[4], (planes,), jnp.float32),
        "bn1_v": 1.0 + 0.1 * jax.random.uniform(ks[5], (planes,), jnp.float32),
        "bn2_g": 1.0 + 0.1 * jax.random.normal(ks[6], (planes,), jnp.float32),
        "bn2_b": 0.1 * jax.random.normal(ks[7], (planes,), jnp.float32),
        "bn2_m": jnp.zeros((planes,), jnp.float32),
        "bn2_v": jnp.ones((planes,), jnp.float32),
    }


if __name__ == "__main__":
    # inplanes = planes = 8, W*C = 128 (lane-dense), Nb = 8 images/step -> grid=(2,)
    N, C, H, W = 16, 8, 16, 16
    key = jax.random.PRNGKey(0)
    kx, kp = jax.random.split(key)
    x = jax.random.normal(kx, (N, C, H, W), jnp.float32)
    params = make_params(kp, C, C)

    out = basic_block_pallas(x, params)
    out = jax.block_until_ready(out)

    ref = basic_block_reference(x, params)
    assert out.shape == ref.shape == (N, C, H, W)
    # bf16 matmul operands (f32 accumulation) -> widened tolerance vs f32 ref.
    assert jnp.allclose(out, ref, atol=5e-2, rtol=5e-2), (
        "max abs diff = %f" % float(jnp.max(jnp.abs(out - ref))))

    print("KERNEL_OK")
</pallas_src>

<mosaic_0001>
module attributes {stable_mosaic.version = 11 : i64} {
  func.func @_basic_block_kernel(%arg0: i32, %arg1: memref<8x16x128xf32, #tpu.memory_space<vmem>>, %arg2: memref<3x128x128xbf16, #tpu.memory_space<vmem>>, %arg3: memref<3x128x128xbf16, #tpu.memory_space<vmem>>, %arg4: memref<4x128xf32, #tpu.memory_space<vmem>>, %arg5: memref<8x16x128xf32, #tpu.memory_space<vmem>>, %arg6: memref<144x128xbf16, #tpu.memory_space<vmem>>) attributes {dimension_semantics = [#tpu.dimension_semantics<parallel>], iteration_bounds = array<i64: 2>, scalar_prefetch = 0 : i64, scratch_operands = 1 : i64, tpu.core_type = #tpu.core_type<tc>, window_params = [{transform_indices = @transform_0, window_bounds = array<i64: 8, 16, 128>}, {pipeline_mode = #tpu.pipeline_mode<synchronous>, transform_indices = @transform_1, window_bounds = array<i64: 3, 128, 128>}, {pipeline_mode = #tpu.pipeline_mode<synchronous>, transform_indices = @transform_2, window_bounds = array<i64: 3, 128, 128>}, {pipeline_mode = #tpu.pipeline_mode<synchronous>, transform_indices = @transform_3, window_bounds = array<i64: 4, 128>}, {transform_indices = @transform_4, window_bounds = array<i64: 8, 16, 128>}]} {
    %cst = arith.constant 0.000000e+00 : bf16
    %0 = vector.broadcast %cst : bf16 to vector<144x128xbf16>
    %c0 = arith.constant 0 : index
    %c0_0 = arith.constant 0 : index
    %1 = vector.load %arg6[%c0, %c0_0] : memref<144x128xbf16, #tpu.memory_space<vmem>>, vector<144x128xbf16>
    tpu.vector_store %arg6[%c0, %c0_0], %0 {strides = array<i32>} : memref<144x128xbf16, #tpu.memory_space<vmem>>, vector<144x128xbf16>,
    %c0_1 = arith.constant 0 : index
    %c0_2 = arith.constant 0 : index
    %c0_3 = arith.constant 0 : index
    %2 = vector.load %arg1[%c0_1, %c0_2, %c0_3] : memref<8x16x128xf32, #tpu.memory_space<vmem>>, vector<1x16x128xf32>
    %3 = vector.shape_cast %2 : vector<1x16x128xf32> to vector<16x128xf32>
    %4 = arith.truncf %3 : vector<16x128xf32> to vector<16x128xbf16>
    %c1 = arith.constant 1 : index
    %c0_4 = arith.constant 0 : index
    %5 = vector.load %arg6[%c1, %c0_4] : memref<144x128xbf16, #tpu.memory_space<vmem>>, vector<16x128xbf16>
    tpu.vector_store %arg6[%c1, %c0_4], %4 {strides = array<i32>} : memref<144x128xbf16, #tpu.memory_space<vmem>>, vector<16x128xbf16>,
    %c1_5 = arith.constant 1 : index
    %c0_6 = arith.constant 0 : index
    %c0_7 = arith.constant 0 : index
    %6 = vector.load %arg1[%c1_5, %c0_6, %c0_7] : memref<8x16x128xf32, #tpu.memory_space<vmem>>, vector<1x16x128xf32>
    %7 = vector.shape_cast %6 : vector<1x16x128xf32> to vector<16x128xf32>
    %8 = arith.truncf %7 : vector<16x128xf32> to vector<16x128xbf16>
    %c19 = arith.constant 19 : index
    %c0_8 = arith.constant 0 : index
    %9 = vector.load %arg6[%c19, %c0_8] : memref<144x128xbf16, #tpu.memory_space<vmem>>, vector<16x128xbf16>
    tpu.vector_store %arg6[%c19, %c0_8], %8 {strides = array<i32>} : memref<144x128xbf16, #tpu.memory_space<vmem>>, vector<16x128xbf16>,
    %c2 = arith.constant 2 : index
    %c0_9 = arith.constant 0 : index
    %c0_10 = arith.constant 0 : index
    %10 = vector.load %arg1[%c2, %c0_9, %c0_10] : memref<8x16x128xf32, #tpu.memory_space<vmem>>, vector<1x16x128xf32>
    %11 = vector.shape_cast %10 : vector<1x16x128xf32> to vector<16x128xf32>
    %12 = arith.truncf %11 : vector<16x128xf32> to vector<16x128xbf16>
    %c37 = arith.constant 37 : index
    %c0_11 = arith.constant 0 : index
    %13 = vector.load %arg6[%c37, %c0_11] : memref<144x128xbf16, #tpu.memory_space<vmem>>, vector<16x128xbf16>
    tpu.vector_store %arg6[%c37, %c0_11], %12 {strides = array<i32>} : memref<144x128xbf16, #tpu.memory_space<vmem>>, vector<16x128xbf16>,
    %c3 = arith.constant 3 : index
    %c0_12 = arith.constant 0 : index
    %c0_13 = arith.constant 0 : index
    %14 = vector.load %arg1[%c3, %c0_12, %c0_13] : memref<8x16x128xf32, #tpu.memory_space<vmem>>, vector<1x16x128xf32>
    %15 = vector.shape_cast %14 : vector<1x16x128xf32> to vector<16x128xf32>
    %16 = arith.truncf %15 : vector<16x128xf32> to vector<16x128xbf16>
    %c55 = arith.constant 55 : index
    %c0_14 = arith.constant 0 : index
    %17 = vector.load %arg6[%c55, %c0_14] : memref<144x128xbf16, #tpu.memory_space<vmem>>, vector<16x128xbf16>
    tpu.vector_store %arg6[%c55, %c0_14], %16 {strides = array<i32>} : memref<144x128xbf16, #tpu.memory_space<vmem>>, vector<16x128xbf16>,
    %c4 = arith.constant 4 : index
    %c0_15 = arith.constant 0 : index
    %c0_16 = arith.constant 0 : index
    %18 = vector.load %arg1[%c4, %c0_15, %c0_16] : memref<8x16x128xf32, #tpu.memory_space<vmem>>, vector<1x16x128xf32>
    %19 = vector.shape_cast %18 : vector<1x16x128xf32> to vector<16x128xf32>
    %20 = arith.truncf %19 : vector<16x128xf32> to vector<16x128xbf16>
    %c73 = arith.constant 73 : index
    %c0_17 = arith.constant 0 : index
    %21 = vector.load %arg6[%c73, %c0_17] : memref<144x128xbf16, #tpu.memory_space<vmem>>, vector<16x128xbf16>
    tpu.vector_store %arg6[%c73, %c0_17], %20 {strides = array<i32>} : memref<144x128xbf16, #tpu.memory_space<vmem>>, vector<16x128xbf16>,
    %c5 = arith.constant 5 : index
    %c0_18 = arith.constant 0 : index
    %c0_19 = arith.constant 0 : index
    %22 = vector.load %arg1[%c5, %c0_18, %c0_19] : memref<8x16x128xf32, #tpu.memory_space<vmem>>, vector<1x16x128xf32>
    %23 = vector.shape_cast %22 : vector<1x16x128xf32> to vector<16x128xf32>
    %24 = arith.truncf %23 : vector<16x128xf32> to vector<16x128xbf16>
    %c91 = arith.constant 91 : index
    %c0_20 = arith.constant 0 : index
    %25 = vector.load %arg6[%c91, %c0_20] : memref<144x128xbf16, #tpu.memory_space<vmem>>, vector<16x128xbf16>
    tpu.vector_store %arg6[%c91, %c0_20], %24 {strides = array<i32>} : memref<144x128xbf16, #tpu.memory_space<vmem>>, vector<16x128xbf16>,
    %c6 = arith.constant 6 : index
    %c0_21 = arith.constant 0 : index
    %c0_22 = arith.constant 0 : index
    %26 = vector.load %arg1[%c6, %c0_21, %c0_22] : memref<8x16x128xf32, #tpu.memory_space<vmem>>, vector<1x16x128xf32>
    %27 = vector.shape_cast %26 : vector<1x16x128xf32> to vector<16x128xf32>
    %28 = arith.truncf %27 : vector<16x128xf32> to vector<16x128xbf16>
    %c109 = arith.constant 109 : index
    %c0_23 = arith.constant 0 : index
    %29 = vector.load %arg6[%c109, %c0_23] : memref<144x128xbf16, #tpu.memory_space<vmem>>, vector<16x128xbf16>
    tpu.vector_store %arg6[%c109, %c0_23], %28 {strides = array<i32>} : memref<144x128xbf16, #tpu.memory_space<vmem>>, vector<16x128xbf16>,
    %c7 = arith.constant 7 : index
    %c0_24 = arith.constant 0 : index
    %c0_25 = arith.constant 0 : index
    %30 = vector.load %arg1[%c7, %c0_24, %c0_25] : memref<8x16x128xf32, #tpu.memory_space<vmem>>, vector<1x16x128xf32>
    %31 = vector.shape_cast %30 : vector<1x16x128xf32> to vector<16x128xf32>
    %32 = arith.truncf %31 : vector<16x128xf32> to vector<16x128xbf16>
    %c127 = arith.constant 127 : index
    %c0_26 = arith.constant 0 : index
    %33 = vector.load %arg6[%c127, %c0_26] : memref<144x128xbf16, #tpu.memory_space<vmem>>, vector<16x128xbf16>
    tpu.vector_store %arg6[%c127, %c0_26], %32 {strides = array<i32>} : memref<144x128xbf16, #tpu.memory_space<vmem>>, vector<16x128xbf16>,
    %34 = tpu.iota {dimensions = array<i32: 0>} : vector<142x1xi32>
    %c18_i32 = arith.constant 18 : i32
    %c0_i32 = arith.constant 0 : i32
    %35 = arith.cmpi eq, %c18_i32, %c0_i32 : i32
    %c1_i32 = arith.constant 1 : i32
    %36 = arith.select %35, %c1_i32, %c18_i32 : i32
    %37 = vector.broadcast %36 : i32 to vector<142x1xi32>
    %38 = arith.remsi %34, %37 : vector<142x1xi32>
    %c0_i32_27 = arith.constant 0 : i32
    %39 = vector.broadcast %c0_i32_27 : i32 to vector<142x1xi32>
    %40 = arith.cmpi ne, %38, %39 : vector<142x1xi32>
    %c0_i32_28 = arith.constant 0 : i32
    %41 = vector.broadcast %c0_i32_28 : i32 to vector<142x1xi32>
    %42 = arith.cmpi slt, %38, %41 : vector<142x1xi32>
    %c0_i32_29 = arith.constant 0 : i32
    %43 = arith.cmpi slt, %36, %c0_i32_29 : i32
    %44 = vector.broadcast %43 : i1 to vector<142x1xi1>
    %45 = vector.broadcast %44 : vector<142x1xi1> to vector<142x1xi1>
    %46 = arith.xori %42, %45 : vector<142x1xi1>
    %47 = arith.andi %46, %40 : vector<142x1xi1>
    %48 = vector.broadcast %36 : i32 to vector<142x1xi32>
    %49 = arith.addi %38, %48 : vector<142x1xi32>
    %50 = arith.select %47, %49, %38 : vector<142x1xi1>, vector<142x1xi32>
    %c16_i32 = arith.constant 16 : i32
    %51 = vector.broadcast %c16_i32 : i32 to vector<142x1xi32>
    %52 = arith.cmpi slt, %50, %51 : vector<142x1xi32>
    %c0_30 = arith.constant 0 : index
    %c0_31 = arith.constant 0 : index
    %53 = vector.load %arg6[%c0_30, %c0_31] : memref<144x128xbf16, #tpu.memory_space<vmem>>, vector<142x128xbf16>
    %c0_32 = arith.constant 0 : index
    %c0_33 = arith.constant 0 : index
    %c0_34 = arith.constant 0 : index
    %54 = vector.load %arg2[%c0_32, %c0_33, %c0_34] : memref<3x128x128xbf16, #tpu.memory_space<vmem>>, vector<1x128x128xbf16>
    %55 = vector.shape_cast %54 : vector<1x128x128xbf16> to vector<128x128xbf16>
    %cst_35 = arith.constant dense<0.000000e+00> : vector<142x128xf32>
    %56 = tpu.matmul %53, %55, %cst_35 {dimension_numbers = #tpu.dot_dimension_numbers<[1], [0], [0], [1], [0, 0, 1, 1], [], []>} : vector<142x128xbf16>, vector<128x128xbf16>, vector<142x128xf32> -> vector<142x128xf32>
    %c1_36 = arith.constant 1 : index
    %c0_37 = arith.constant 0 : index
    %57 = vector.load %arg6[%c1_36, %c0_37] : memref<144x128xbf16, #tpu.memory_space<vmem>>, vector<142x128xbf16>
    %c1_38 = arith.constant 1 : index
    %c0_39 = arith.constant 0 : index
    %c0_40 = arith.constant 0 : index
    %58 = vector.load %arg2[%c1_38, %c0_39, %c0_40] : memref<3x128x128xbf16, #tpu.memory_space<vmem>>, vector<1x128x128xbf16>
    %59 = vector.shape_cast %58 : vector<1x128x128xbf16> to vector<128x128xbf16>
    %cst_41 = arith.constant dense<0.000000e+00> : vector<142x128xf32>
    %60 = tpu.matmul %57, %59, %cst_41 {dimension_numbers = #tpu.dot_dimension_numbers<[1], [0], [0], [1], [0, 0, 1, 1], [], []>} : vector<142x128xbf16>, vector<128x128xbf16>, vector<142x128xf32> -> vector<142x128xf32>
    %61 = arith.addf %56, %60 : vector<142x128xf32>
    %c2_42 = arith.constant 2 : index
    %c0_43 = arith.constant 0 : index
    %62 = vector.load %arg6[%c2_42, %c0_43] : memref<144x128xbf16, #tpu.memory_space<vmem>>, vector<142x128xbf16>
    %c2_44 = arith.constant 2 : index
    %c0_45 = arith.constant 0 : index
    %c0_46 = arith.constant 0 : index
    %63 = vector.load %arg2[%c2_44, %c0_45, %c0_46] : memref<3x128x128xbf16, #tpu.memory_space<vmem>>, vector<1x128x128xbf16>
    %64 = vector.shape_cast %63 : vector<1x128x128xbf16> to vector<128x128xbf16>
    %cst_47 = arith.constant dense<0.000000e+00> : vector<142x128xf32>
    %65 = tpu.matmul %62, %64, %cst_47 {dimension_numbers = #tpu.dot_dimension_numbers<[1], [0], [0], [1], [0, 0, 1, 1], [], []>} : vector<142x128xbf16>, vector<128x128xbf16>, vector<142x128xf32> -> vector<142x128xf32>
    %66 = arith.addf %61, %65 : vector<142x128xf32>
    %c0_48 = arith.constant 0 : index
    %c0_49 = arith.constant 0 : index
    %67 = vector.load %arg4[%c0_48, %c0_49] : memref<4x128xf32, #tpu.memory_space<vmem>>, vector<1x128xf32>
    %68 = vector.broadcast %67 : vector<1x128xf32> to vector<142x128xf32>
    %69 = arith.mulf %66, %68 : vector<142x128xf32>
    %c1_50 = arith.constant 1 : index
    %c0_51 = arith.constant 0 : index
    %70 = vector.load %arg4[%c1_50, %c0_51] : memref<4x128xf32, #tpu.memory_space<vmem>>, vector<1x128xf32>
    %71 = vector.broadcast %70 : vector<1x128xf32> to vector<142x128xf32>
    %72 = arith.addf %69, %71 : vector<142x128xf32>
    %cst_52 = arith.constant 0.000000e+00 : f32
    %73 = vector.broadcast %cst_52 : f32 to vector<142x128xf32>
    %74 = arith.maximumf %72, %73 : vector<142x128xf32>
    %cst_53 = arith.constant 0.000000e+00 : f32
    %75 = vector.shape_cast %52 : vector<142x1xi1> to vector<142x1xi1>
    %76 = vector.broadcast %75 : vector<142x1xi1> to vector<142x128xi1>
    %77 = vector.broadcast %cst_53 : f32 to vector<142x128xf32>
    %78 = arith.select %76, %74, %77 : vector<142x128xi1>, vector<142x128xf32>
    %79 = arith.truncf %78 : vector<142x128xf32> to vector<142x128xbf16>
    %c1_54 = arith.constant 1 : index
    %c0_55 = arith.constant 0 : index
    %80 = vector.load %arg6[%c1_54, %c0_55] : memref<144x128xbf16, #tpu.memory_space<vmem>>, vector<142x128xbf16>
    tpu.vector_store %arg6[%c1_54, %c0_55], %79 {strides = array<i32>} : memref<144x128xbf16, #tpu.memory_space<vmem>>, vector<142x128xbf16>,
    %c0_56 = arith.constant 0 : index
    %c0_57 = arith.constant 0 : index
    %81 = vector.load %arg6[%c0_56, %c0_57] : memref<144x128xbf16, #tpu.memory_space<vmem>>, vector<142x128xbf16>
    %c0_58 = arith.constant 0 : index
    %c0_59 = arith.constant 0 : index
    %c0_60 = arith.constant 0 : index
    %82 = vector.load %arg3[%c0_58, %c0_59, %c0_60] : memref<3x128x128xbf16, #tpu.memory_space<vmem>>, vector<1x128x128xbf16>
    %83 = vector.shape_cast %82 : vector<1x128x128xbf16> to vector<128x128xbf16>
    %cst_61 = arith.constant dense<0.000000e+00> : vector<142x128xf32>
    %84 = tpu.matmul %81, %83, %cst_61 {dimension_numbers = #tpu.dot_dimension_numbers<[1], [0], [0], [1], [0, 0, 1, 1], [], []>} : vector<142x128xbf16>, vector<128x128xbf16>, vector<142x128xf32> -> vector<142x128xf32>
    %c1_62 = arith.constant 1 : index
    %c0_63 = arith.constant 0 : index
    %85 = vector.load %arg6[%c1_62, %c0_63] : memref<144x128xbf16, #tpu.memory_space<vmem>>, vector<142x128xbf16>
    %c1_64 = arith.constant 1 : index
    %c0_65 = arith.constant 0 : index
    %c0_66 = arith.constant 0 : index
    %86 = vector.load %arg3[%c1_64, %c0_65, %c0_66] : memref<3x128x128xbf16, #tpu.memory_space<vmem>>, vector<1x128x128xbf16>
    %87 = vector.shape_cast %86 : vector<1x128x128xbf16> to vector<128x128xbf16>
    %cst_67 = arith.constant dense<0.000000e+00> : vector<142x128xf32>
    %88 = tpu.matmul %85, %87, %cst_67 {dimension_numbers = #tpu.dot_dimension_numbers<[1], [0], [0], [1], [0, 0, 1, 1], [], []>} : vector<142x128xbf16>, vector<128x128xbf16>, vector<142x128xf32> -> vector<142x128xf32>
    %89 = arith.addf %84, %88 : vector<142x128xf32>
    %c2_68 = arith.constant 2 : index
    %c0_69 = arith.constant 0 : index
    %90 = vector.load %arg6[%c2_68, %c0_69] : memref<144x128xbf16, #tpu.memory_space<vmem>>, vector<142x128xbf16>
    %c2_70 = arith.constant 2 : index
    %c0_71 = arith.constant 0 : index
    %c0_72 = arith.constant 0 : index
    %91 = vector.load %arg3[%c2_70, %c0_71, %c0_72] : memref<3x128x128xbf16, #tpu.memory_space<vmem>>, vector<1x128x128xbf16>
    %92 = vector.shape_cast %91 : vector<1x128x128xbf16> to vector<128x128xbf16>
    %cst_73 = arith.constant dense<0.000000e+00> : vector<142x128xf32>
    %93 = tpu.matmul %90, %92, %cst_73 {dimension_numbers = #tpu.dot_dimension_numbers<[1], [0], [0], [1], [0, 0, 1, 1], [], []>} : vector<142x128xbf16>, vector<128x128xbf16>, vector<142x128xf32> -> vector<142x128xf32>
    %94 = arith.addf %89, %93 : vector<142x128xf32>
    %c2_74 = arith.constant 2 : index
    %c0_75 = arith.constant 0 : index
    %95 = vector.load %arg4[%c2_74, %c0_75] : memref<4x128xf32, #tpu.memory_space<vmem>>, vector<1x128xf32>
    %96 = vector.broadcast %95 : vector<1x128xf32> to vector<142x128xf32>
    %97 = arith.mulf %94, %96 : vector<142x128xf32>
    %c3_76 = arith.constant 3 : index
    %c0_77 = arith.constant 0 : index
    %98 = vector.load %arg4[%c3_76, %c0_77] : memref<4x128xf32, #tpu.memory_space<vmem>>, vector<1x128xf32>
    %99 = vector.broadcast %98 : vector<1x128xf32> to vector<142x128xf32>
    %100 = arith.addf %97, %99 : vector<142x128xf32>
    %101 = vector.extract_strided_slice %100 {offsets = [0, 0], sizes = [16, 128], strides = [1, 1]} : vector<142x128xf32> to vector<16x128xf32>
    %c0_78 = arith.constant 0 : index
    %c0_79 = arith.constant 0 : index
    %c0_80 = arith.constant 0 : index
    %102 = vector.load %arg1[%c0_78, %c0_79, %c0_80] : memref<8x16x128xf32, #tpu.memory_space<vmem>>, vector<1x16x128xf32>
    %103 = vector.shape_cast %102 : vector<1x16x128xf32> to vector<16x128xf32>
    %104 = arith.addf %101, %103 : vector<16x128xf32>
    %cst_81 = arith.constant 0.000000e+00 : f32
    %105 = vector.broadcast %cst_81 : f32 to vector<16x128xf32>
    %106 = arith.maximumf %104, %105 : vector<16x128xf32>
    %c0_82 = arith.constant 0 : index
    %c0_83 = arith.constant 0 : index
    %c0_84 = arith.constant 0 : index
    %107 = vector.load %arg5[%c0_82, %c0_83, %c0_84] : memref<8x16x128xf32, #tpu.memory_space<vmem>>, vector<1x16x128xf32>
    %108 = vector.shape_cast %107 : vector<1x16x128xf32> to vector<16x128xf32>
    %109 = vector.shape_cast %106 : vector<16x128xf32> to vector<1x16x128xf32>
    tpu.vector_store %arg5[%c0_82, %c0_83, %c0_84], %109 {strides = array<i32>} : memref<8x16x128xf32, #tpu.memory_space<vmem>>, vector<1x16x128xf32>,
    %110 = vector.extract_strided_slice %100 {offsets = [18, 0], sizes = [16, 128], strides = [1, 1]} : vector<142x128xf32> to vector<16x128xf32>
    %c1_85 = arith.constant 1 : index
    %c0_86 = arith.constant 0 : index
    %c0_87 = arith.constant 0 : index
    %111 = vector.load %arg1[%c1_85, %c0_86, %c0_87] : memref<8x16x128xf32, #tpu.memory_space<vmem>>, vector<1x16x128xf32>
    %112 = vector.shape_cast %111 : vector<1x16x128xf32> to vector<16x128xf32>
    %113 = arith.addf %110, %112 : vector<16x128xf32>
    %cst_88 = arith.constant 0.000000e+00 : f32
    %114 = vector.broadcast %cst_88 : f32 to vector<16x128xf32>
    %115 = arith.maximumf %113, %114 : vector<16x128xf32>
    %c1_89 = arith.constant 1 : index
    %c0_90 = arith.constant 0 : index
    %c0_91 = arith.constant 0 : index
    %116 = vector.load %arg5[%c1_89, %c0_90, %c0_91] : memref<8x16x128xf32, #tpu.memory_space<vmem>>, vector<1x16x128xf32>
    %117 = vector.shape_cast %116 : vector<1x16x128xf32> to vector<16x128xf32>
    %118 = vector.shape_cast %115 : vector<16x128xf32> to vector<1x16x128xf32>
    tpu.vector_store %arg5[%c1_89, %c0_90, %c0_91], %118 {strides = array<i32>} : memref<8x16x128xf32, #tpu.memory_space<vmem>>, vector<1x16x128xf32>,
    %119 = vector.extract_strided_slice %100 {offsets = [36, 0], sizes = [16, 128], strides = [1, 1]} : vector<142x128xf32> to vector<16x128xf32>
    %c2_92 = arith.constant 2 : index
    %c0_93 = arith.constant 0 : index
    %c0_94 = arith.constant 0 : index
    %120 = vector.load %arg1[%c2_92, %c0_93, %c0_94] : memref<8x16x128xf32, #tpu.memory_space<vmem>>, vector<1x16x128xf32>
    %121 = vector.shape_cast %120 : vector<1x16x128xf32> to vector<16x128xf32>
    %122 = arith.addf %119, %121 : vector<16x128xf32>
    %cst_95 = arith.constant 0.000000e+00 : f32
    %123 = vector.broadcast %cst_95 : f32 to vector<16x128xf32>
    %124 = arith.maximumf %122, %123 : vector<16x128xf32>
    %c2_96 = arith.constant 2 : index
    %c0_97 = arith.constant 0 : index
    %c0_98 = arith.constant 0 : index
    %125 = vector.load %arg5[%c2_96, %c0_97, %c0_98] : memref<8x16x128xf32, #tpu.memory_space<vmem>>, vector<1x16x128xf32>
    %126 = vector.shape_cast %125 : vector<1x16x128xf32> to vector<16x128xf32>
    %127 = vector.shape_cast %124 : vector<16x128xf32> to vector<1x16x128xf32>
    tpu.vector_store %arg5[%c2_96, %c0_97, %c0_98], %127 {strides = array<i32>} : memref<8x16x128xf32, #tpu.memory_space<vmem>>, vector<1x16x128xf32>,
    %128 = vector.extract_strided_slice %100 {offsets = [54, 0], sizes = [16, 128], strides = [1, 1]} : vector<142x128xf32> to vector<16x128xf32>
    %c3_99 = arith.constant 3 : index
    %c0_100 = arith.constant 0 : index
    %c0_101 = arith.constant 0 : index
    %129 = vector.load %arg1[%c3_99, %c0_100, %c0_101] : memref<8x16x128xf32, #tpu.memory_space<vmem>>, vector<1x16x128xf32>
    %130 = vector.shape_cast %129 : vector<1x16x128xf32> to vector<16x128xf32>
    %131 = arith.addf %128, %130 : vector<16x128xf32>
    %cst_102 = arith.constant 0.000000e+00 : f32
    %132 = vector.broadcast %cst_102 : f32 to vector<16x128xf32>
    %133 = arith.maximumf %131, %132 : vector<16x128xf32>
    %c3_103 = arith.constant 3 : index
    %c0_104 = arith.constant 0 : index
    %c0_105 = arith.constant 0 : index
    %134 = vector.load %arg5[%c3_103, %c0_104, %c0_105] : memref<8x16x128xf32, #tpu.memory_space<vmem>>, vector<1x16x128xf32>
    %135 = vector.shape_cast %134 : vector<1x16x128xf32> to vector<16x128xf32>
    %136 = vector.shape_cast %133 : vector<16x128xf32> to vector<1x16x128xf32>
    tpu.vector_store %arg5[%c3_103, %c0_104, %c0_105], %136 {strides = array<i32>} : memref<8x16x128xf32, #tpu.memory_space<vmem>>, vector<1x16x128xf32>,
    %137 = vector.extract_strided_slice %100 {offsets = [72, 0], sizes = [16, 128], strides = [1, 1]} : vector<142x128xf32> to vector<16x128xf32>
    %c4_106 = arith.constant 4 : index
    %c0_107 = arith.constant 0 : index
    %c0_108 = arith.constant 0 : index
    %138 = vector.load %arg1[%c4_106, %c0_107, %c0_108] : memref<8x16x128xf32, #tpu.memory_space<vmem>>, vector<1x16x128xf32>
    %139 = vector.shape_cast %138 : vector<1x16x128xf32> to vector<16x128xf32>
    %140 = arith.addf %137, %139 : vector<16x128xf32>
    %cst_109 = arith.constant 0.000000e+00 : f32
    %141 = vector.broadcast %cst_109 : f32 to vector<16x128xf32>
    %142 = arith.maximumf %140, %141 : vector<16x128xf32>
    %c4_110 = arith.constant 4 : index
    %c0_111 = arith.constant 0 : index
    %c0_112 = arith.constant 0 : index
    %143 = vector.load %arg5[%c4_110, %c0_111, %c0_112] : memref<8x16x128xf32, #tpu.memory_space<vmem>>, vector<1x16x128xf32>
    %144 = vector.shape_cast %143 : vector<1x16x128xf32> to vector<16x128xf32>
    %145 = vector.shape_cast %142 : vector<16x128xf32> to vector<1x16x128xf32>
    tpu.vector_store %arg5[%c4_110, %c0_111, %c0_112], %145 {strides = array<i32>} : memref<8x16x128xf32, #tpu.memory_space<vmem>>, vector<1x16x128xf32>,
    %146 = vector.extract_strided_slice %100 {offsets = [90, 0], sizes = [16, 128], strides = [1, 1]} : vector<142x128xf32> to vector<16x128xf32>
    %c5_113 = arith.constant 5 : index
    %c0_114 = arith.constant 0 : index
    %c0_115 = arith.constant 0 : index
    %147 = vector.load %arg1[%c5_113, %c0_114, %c0_115] : memref<8x16x128xf32, #tpu.memory_space<vmem>>, vector<1x16x128xf32>
    %148 = vector.shape_cast %147 : vector<1x16x128xf32> to vector<16x128xf32>
    %149 = arith.addf %146, %148 : vector<16x128xf32>
    %cst_116 = arith.constant 0.000000e+00 : f32
    %150 = vector.broadcast %cst_116 : f32 to vector<16x128xf32>
    %151 = arith.maximumf %149, %150 : vector<16x128xf32>
    %c5_117 = arith.constant 5 : index
    %c0_118 = arith.constant 0 : index
    %c0_119 = arith.constant 0 : index
    %152 = vector.load %arg5[%c5_117, %c0_118, %c0_119] : memref<8x16x128xf32, #tpu.memory_space<vmem>>, vector<1x16x128xf32>
    %153 = vector.shape_cast %152 : vector<1x16x128xf32> to vector<16x128xf32>
    %154 = vector.shape_cast %151 : vector<16x128xf32> to vector<1x16x128xf32>
    tpu.vector_store %arg5[%c5_117, %c0_118, %c0_119], %154 {strides = array<i32>} : memref<8x16x128xf32, #tpu.memory_space<vmem>>, vector<1x16x128xf32>,
    %155 = vector.extract_strided_slice %100 {offsets = [108, 0], sizes = [16, 128], strides = [1, 1]} : vector<142x128xf32> to vector<16x128xf32>
    %c6_120 = arith.constant 6 : index
    %c0_121 = arith.constant 0 : index
    %c0_122 = arith.constant 0 : index
    %156 = vector.load %arg1[%c6_120, %c0_121, %c0_122] : memref<8x16x128xf32, #tpu.memory_space<vmem>>, vector<1x16x128xf32>
    %157 = vector.shape_cast %156 : vector<1x16x128xf32> to vector<16x128xf32>
    %158 = arith.addf %155, %157 : vector<16x128xf32>
    %cst_123 = arith.constant 0.000000e+00 : f32
    %159 = vector.broadcast %cst_123 : f32 to vector<16x128xf32>
    %160 = arith.maximumf %158, %159 : vector<16x128xf32>
    %c6_124 = arith.constant 6 : index
    %c0_125 = arith.constant 0 : index
    %c0_126 = arith.constant 0 : index
    %161 = vector.load %arg5[%c6_124, %c0_125, %c0_126] : memref<8x16x128xf32, #tpu.memory_space<vmem>>, vector<1x16x128xf32>
    %162 = vector.shape_cast %161 : vector<1x16x128xf32> to vector<16x128xf32>
    %163 = vector.shape_cast %160 : vector<16x128xf32> to vector<1x16x128xf32>
    tpu.vector_store %arg5[%c6_124, %c0_125, %c0_126], %163 {strides = array<i32>} : memref<8x16x128xf32, #tpu.memory_space<vmem>>, vector<1x16x128xf32>,
    %164 = vector.extract_strided_slice %100 {offsets = [126, 0], sizes = [16, 128], strides = [1, 1]} : vector<142x128xf32> to vector<16x128xf32>
    %c7_127 = arith.constant 7 : index
    %c0_128 = arith.constant 0 : index
    %c0_129 = arith.constant 0 : index
    %165 = vector.load %arg1[%c7_127, %c0_128, %c0_129] : memref<8x16x128xf32, #tpu.memory_space<vmem>>, vector<1x16x128xf32>
    %166 = vector.shape_cast %165 : vector<1x16x128xf32> to vector<16x128xf32>
    %167 = arith.addf %164, %166 : vector<16x128xf32>
    %cst_130 = arith.constant 0.000000e+00 : f32
    %168 = vector.broadcast %cst_130 : f32 to vector<16x128xf32>
    %169 = arith.maximumf %167, %168 : vector<16x128xf32>
    %c7_131 = arith.constant 7 : index
    %c0_132 = arith.constant 0 : index
    %c0_133 = arith.constant 0 : index
    %170 = vector.load %arg5[%c7_131, %c0_132, %c0_133] : memref<8x16x128xf32, #tpu.memory_space<vmem>>, vector<1x16x128xf32>
    %171 = vector.shape_cast %170 : vector<1x16x128xf32> to vector<16x128xf32>
    %172 = vector.shape_cast %169 : vector<16x128xf32> to vector<1x16x128xf32>
    tpu.vector_store %arg5[%c7_131, %c0_132, %c0_133], %172 {strides = array<i32>} : memref<8x16x128xf32, #tpu.memory_space<vmem>>, vector<1x16x128xf32>,
    return
  }
  func.func @transform_0(%arg0: i32) -> (i32, i32, i32) {
    %c0_i32 = arith.constant 0 : i32
    %c0_i32_0 = arith.constant 0 : i32
    %c0_i32_1 = arith.constant 0 : i32
    return %arg0, %c0_i32, %c0_i32_0 : i32, i32, i32
  }
  func.func @transform_1(%arg0: i32) -> (i32, i32, i32) {
    %c0_i32 = arith.constant 0 : i32
    %c0_i32_0 = arith.constant 0 : i32
    %c0_i32_1 = arith.constant 0 : i32
    %c0_i32_2 = arith.constant 0 : i32
    return %c0_i32, %c0_i32_0, %c0_i32_1 : i32, i32, i32
  }
  func.func @transform_2(%arg0: i32) -> (i32, i32, i32) {
    %c0_i32 = arith.constant 0 : i32
    %c0_i32_0 = arith.constant 0 : i32
    %c0_i32_1 = arith.constant 0 : i32
    %c0_i32_2 = arith.constant 0 : i32
    return %c0_i32, %c0_i32_0, %c0_i32_1 : i32, i32, i32
  }
  func.func @transform_3(%arg0: i32) -> (i32, i32) {
    %c0_i32 = arith.constant 0 : i32
    %c0_i32_0 = arith.constant 0 : i32
    %c0_i32_1 = arith.constant 0 : i32
    return %c0_i32, %c0_i32_0 : i32, i32
  }
  func.func @transform_4(%arg0: i32) -> (i32, i32, i32) {
    %c0_i32 = arith.constant 0 : i32
    %c0_i32_0 = arith.constant 0 : i32
    %c0_i32_1 = arith.constant 0 : i32
    return %arg0, %c0_i32, %c0_i32_0 : i32, i32, i32
  }
}

</mosaic_0001>

<llo_original>
// kernel: tpu_custom_call.1
$region0: #{tpu_custom_call.1}
  #allocation0 [shape = 'u32[]', space=smem, size = 0x4, offset = 0x4, fixed_abs, tag = 'smem constant byte address 0x4 - core index']
  #allocation1 [shape = 'u32[72,128]{1,0:T(1,128)}', space=vmem, size = 0x9000, scoped, tag = 'internal scratch']
  #allocation2 [shape = 'bf16[144,128]{1,0:T(8,128)(2,1)}', space=vmem, size = 0x9000, scoped, tag = 'scratch operand']
  %s0 = inlined_call_operand.hbm [shape: f32[16,16,128], index: 0, kind: input, shape index: {}]
  %s1 = inlined_call_operand.hbm [shape: bf16[3,128,128], index: 1, kind: input, shape index: {}]
  %s2 = inlined_call_operand.hbm [shape: bf16[3,128,128], index: 2, kind: input, shape index: {}]
  %s3 = inlined_call_operand.hbm [shape: f32[4,128], index: 3, kind: input, shape index: {}]
  %s4 = inlined_call_operand.hbm [shape: f32[16,16,128], index: 4, kind: output, shape index: {}]
  %s5 = sld [smem:[#allocation0]]
  $region65: #{tpu_custom_call.1} parent=0
    _
  %s7 = ssub.s32 1, %s5
  %s8 = scalar_select 0, %s7, %s5
  $region1: #{tpu_custom_call.1} parent=0
    #allocation3 [shape = 'u8[131072]{0}', space=vmem, size = 0x20000, scoped, tag = 'input window, operand 0']
    #allocation4 [shape = 's32[2]{0}', space=sflag, size = 0x8, scoped, tag = 'scoped memory for tpu_custom_call.1']
    #allocation5 [shape = 's32[2]{0}', space=sflag, size = 0x8, scoped, tag = 'scoped memory for tpu_custom_call.1']
    #allocation6 [shape = 'u8[98304]{0}', space=vmem, size = 0x18000, scoped, tag = 'input window, operand 1, single buffered']
    #allocation7 [shape = 's32[1]{0}', space=sflag, size = 0x4, scoped, tag = 'scoped memory for tpu_custom_call.1']
    #allocation8 [shape = 'u8[98304]{0}', space=vmem, size = 0x18000, scoped, tag = 'input window, operand 2, single buffered']
    #allocation9 [shape = 'u8[2048]{0}', space=vmem, size = 0x800, scoped, tag = 'input window, operand 3, single buffered']
    #allocation10 [shape = 's32[1]{0}', space=sflag, size = 0x4, scoped, tag = 'scoped memory for tpu_custom_call.1']
    #allocation11 [shape = 'u8[131072]{0}', space=vmem, size = 0x20000, scoped, tag = 'output window, operand 0']
    %9 = vsyncpa [#allocation4], 0
    %s10 = scalar_lea.sflag [#allocation4], 1
    %11 = vsyncpa %s10, 0
    %12 = vsyncpa [#allocation7], 0
    %13 = vsyncpa [#allocation10], 0
    %14 = vsyncpa [#allocation5], 0
    %s15 = scalar_lea.sflag [#allocation5], 1
    %16 = vsyncpa %s15, 0
    loop: start=0, step=1, limit=4
    $region2: #{tpu_custom_call.1} parent=1 // loop_pre_header
      _
    $region3: #{tpu_custom_call.1} parent=1 // loop_header
      %s18 = sphi 0, %s22
      %p19 = scmp.ge.s32.totalorder %s18, 4
      %s28 = sphi 0, %s30
      %s31 = sphi 0, %s28
      %s32 = sphi 0, %s31
      %s48 = sphi 0, %s32
      %s52 = sphi 0, %s52
      %s54 = sphi 0, %s52
      %s55 = sphi 0, %s54
      %s69 = sphi 0, %s55
      %s73 = sphi 0, %s73
      %s75 = sphi 0, %s73
      %s76 = sphi 0, %s75
      %s90 = sphi 0, %s76
      %s94 = sphi 0, %s94
      %s96 = sphi 0, %s94
      %s97 = sphi 0, %s96
      %s111 = sphi 0, %s97
      %s117 = sphi 0, %s119
      %s120 = sphi 0, %s117
      %s121 = sphi 0, %s120
      %s137 = sphi 0, %s121
    $region4: #{tpu_custom_call.1} parent=1 // loop_header_branch
      %21 = sbr.rel (%p19) target = $region8
    $region5: #{tpu_custom_call.1} parent=1 // loop_body
      %s23 = ssub.s32 %s18, 1
      %s24 = ssub.s32 %s18, 2
      %s25 = sadd.s32 %s18, 1
      %s26 = ssub.s32 %s18, %s25
      %p27 = scmp.eq.s32.totalorder %s26, 0
      %s29 = sadd.s32 %s28, 1
      %s30 = scalar_select %p27, %s28, %s29
      %p33 = pneg %p27
      %p34 = scmp.eq.s32.totalorder %s18, 1
      %p35 = por %p33, %p34
      %p36 = scmp.ne.s32.totalorder %s28, %s31
      %p37 = scmp.eq.s32.totalorder %s18, 0
      %p38 = por %p36, %p37
      %p39 = scmp.ne.s32.totalorder %s28, %s31
      %p40 = scmp.eq.s32.totalorder %s23, 1
      %p41 = por %p39, %p40
      %p42 = scmp.ne.s32.totalorder %s31, %s32
      %p43 = scmp.eq.s32.totalorder %s23, 0
      %p44 = por %p42, %p43
      %p45 = scmp.ne.s32.totalorder %s31, %s32
      %p46 = scmp.eq.s32.totalorder %s24, 1
      %p47 = por %p45, %p46
      %p49 = scmp.ne.s32.totalorder %s32, %s48
      %p50 = scmp.eq.s32.totalorder %s24, 0
      %p51 = por %p49, %p50
      %s53 = sadd.s32 %s52, 1
      %p56 = scmp.eq.s32.totalorder %s18, 1
      %p57 = scmp.ne.s32.totalorder %s52, %s54
      %p58 = scmp.eq.s32.totalorder %s18, 0
      %p59 = por %p57, %p58
      %p60 = scmp.ne.s32.totalorder %s52, %s54
      %p61 = scmp.eq.s32.totalorder %s23, 1
      %p62 = por %p60, %p61
      %p63 = scmp.ne.s32.totalorder %s54, %s55
      %p64 = scmp.eq.s32.totalorder %s23, 0
      %p65 = por %p63, %p64
      %p66 = scmp.ne.s32.totalorder %s54, %s55
      %p67 = scmp.eq.s32.totalorder %s24, 1
      %p68 = por %p66, %p67
      %p70 = scmp.ne.s32.totalorder %s55, %s69
      %p71 = scmp.eq.s32.totalorder %s24, 0
      %p72 = por %p70, %p71
      %s74 = sadd.s32 %s73, 1
      %p77 = scmp.eq.s32.totalorder %s18, 1
      %p78 = scmp.ne.s32.totalorder %s73, %s75
      %p79 = scmp.eq.s32.totalorder %s18, 0
      %p80 = por %p78, %p79
      %p81 = scmp.ne.s32.totalorder %s73, %s75
      %p82 = scmp.eq.s32.totalorder %s23, 1
      %p83 = por %p81, %p82
      %p84 = scmp.ne.s32.totalorder %s75, %s76
      %p85 = scmp.eq.s32.totalorder %s23, 0
      %p86 = por %p84, %p85
      %p87 = scmp.ne.s32.totalorder %s75, %s76
      %p88 = scmp.eq.s32.totalorder %s24, 1
      %p89 = por %p87, %p88
      %p91 = scmp.ne.s32.totalorder %s76, %s90
      %p92 = scmp.eq.s32.totalorder %s24, 0
      %p93 = por %p91, %p92
      %s95 = sadd.s32 %s94, 1
      %p98 = scmp.eq.s32.totalorder %s18, 1
      %p99 = scmp.ne.s32.totalorder %s94, %s96
      %p100 = scmp.eq.s32.totalorder %s18, 0
      %p101 = por %p99, %p100
      %p102 = scmp.ne.s32.totalorder %s94, %s96
      %p103 = scmp.eq.s32.totalorder %s23, 1
      %p104 = por %p102, %p103
      %p105 = scmp.ne.s32.totalorder %s96, %s97
      %p106 = scmp.eq.s32.totalorder %s23, 0
      %p107 = por %p105, %p106
      %p108 = scmp.ne.s32.totalorder %s96, %s97
      %p109 = scmp.eq.s32.totalorder %s24, 1
      %p110 = por %p108, %p109
      %p112 = scmp.ne.s32.totalorder %s97, %s111
      %p113 = scmp.eq.s32.totalorder %s24, 0
      %p114 = por %p112, %p113
      %s115 = ssub.s32 %s18, %s25
      %p116 = scmp.eq.s32.totalorder %s115, 0
      %s118 = sadd.s32 %s117, 1
      %s119 = scalar_select %p116, %s117, %s118
      %p122 = pneg %p116
      %p123 = scmp.eq.s32.totalorder %s18, 1
      %p124 = por %p122, %p123
      %p125 = scmp.ne.s32.totalorder %s117, %s120
      %p126 = scmp.eq.s32.totalorder %s18, 0
      %p127 = por %p125, %p126
      %p128 = scmp.ne.s32.totalorder %s117, %s120
      %p129 = scmp.eq.s32.totalorder %s23, 1
      %p130 = por %p128, %p129
      %p131 = scmp.ne.s32.totalorder %s120, %s121
      %p132 = scmp.eq.s32.totalorder %s23, 0
      %p133 = por %p131, %p132
      %p134 = scmp.ne.s32.totalorder %s120, %s121
      %p135 = scmp.eq.s32.totalorder %s24, 1
      %p136 = por %p134, %p135
      %p138 = scmp.ne.s32.totalorder %s121, %s137
      %p139 = scmp.eq.s32.totalorder %s24, 0
      %p140 = por %p138, %p139
      %p141 = scmp.le.s32.totalorder 1, %s18
      %p142 = scmp.lt.s32.totalorder %s18, 3
      %p143 = pnand %p141, %p142
      %p144 = pneg %p143
      // Predicated region
      $region9: #{tpu_custom_call.1} parent=5 // pred_check
        _
      $region10: #{tpu_custom_call.1} parent=5 // pred_check_branch
        %146 = sbr.rel (%p143) target = $region12
      $region11: #{tpu_custom_call.1} parent=5 // pred_region
        %s147 = ssub.s32 %s18, 1
        // Predicated region
        $region13: #{tpu_custom_call.1} parent=11 // pred_check
          %p148 = pneg %p65
        $region14: #{tpu_custom_call.1} parent=11 // pred_check_branch
          %150 = sbr.rel (%p148) target = $region16
        $region15: #{tpu_custom_call.1} parent=11 // pred_region
          %152 = vsyncadd [#allocation7], 0
          %s153 = sshll.u32 %s1, 4
          %s154 = int_to_ptr.hbm [resolvable:$true] %s153
          %s155 = sshll.u32 [#allocation6], 4
          %s156 = int_to_ptr.vmem [resolvable:$true] %s155
          %161 = dma.hbm_to_vmem [thread:$0]  %s154, 3072, %s156, [#allocation7], 64, 64, 4
        $region16: #{tpu_custom_call.1} parent=11 // pred_fallthru
          _
        // Predicated region
        $region17: #{tpu_custom_call.1} parent=11 // pred_check
          %p162 = pneg %p86
        $region18: #{tpu_custom_call.1} parent=11 // pred_check_branch
          %164 = sbr.rel (%p162) target = $region20
        $region19: #{tpu_custom_call.1} parent=11 // pred_region
          %166 = vsyncadd [#allocation7], 0
          %s167 = sshll.u32 %s2, 4
          %s168 = int_to_ptr.hbm [resolvable:$true] %s167
          %s169 = sshll.u32 [#allocation8], 4
          %s170 = int_to_ptr.vmem [resolvable:$true] %s169
          %175 = dma.hbm_to_vmem [thread:$0]  %s168, 3072, %s170, [#allocation7], 64, 64, 4
        $region20: #{tpu_custom_call.1} parent=11 // pred_fallthru
          _
        // Predicated region
        $region21: #{tpu_custom_call.1} parent=11 // pred_check
          %p176 = pneg %p107
        $region22: #{tpu_custom_call.1} parent=11 // pred_check_branch
          %178 = sbr.rel (%p176) target = $region24
        $region23: #{tpu_custom_call.1} parent=11 // pred_region
          %180 = vsyncadd [#allocation10], 0
          %s182 = sshll.u32 %s3, 4
          %s183 = int_to_ptr.hbm [resolvable:$true] %s182
          %s184 = sshll.u32 [#allocation9], 4
          %s185 = int_to_ptr.vmem [resolvable:$true] %s184
          %187 = dma.hbm_to_vmem [thread:$0]  %s183, 64, %s185, [#allocation10]
        $region24: #{tpu_custom_call.1} parent=11 // pred_fallthru
          _
      $region12: #{tpu_custom_call.1} parent=5 // pred_fallthru
        _
      %p188 = scmp.lt.s32.totalorder %s18, 2
      // Predicated region
      $region25: #{tpu_custom_call.1} parent=5 // pred_check
        %p189 = pneg %p188
      $region26: #{tpu_custom_call.1} parent=5 // pred_check_branch
        %191 = sbr.rel (%p189) target = $region28
      $region27: #{tpu_custom_call.1} parent=5 // pred_region
        // Predicated region
        $region29: #{tpu_custom_call.1} parent=27 // pred_check
          %p192 = pneg %p38
        $region30: #{tpu_custom_call.1} parent=27 // pred_check_branch
          %194 = sbr.rel (%p192) target = $region32
        $region31: #{tpu_custom_call.1} parent=27 // pred_region
          %s195 = sand.u32 %s28, 1
          %s196 = scalar_lea.sflag [#allocation4], %s195
          %s197 = sand.u32 %s28, 1
          %s198 = smul.addr %s197, 128
          %s199 = scalar_lea.vmem [#allocation3], %s198
          %s200 = smul.u32 8, %s18
          %202 = vsyncadd %s196, 0
          %s203 = smul.addr %s200, 2
          %s204 = smul.addr %s203, 8
          %s205 = scalar_lea.hbm %s0, %s204
          %s206 = sshll.u32 %s205, 4
          %s207 = int_to_ptr.hbm [resolvable:$true] %s206
          %s208 = sshll.u32 %s199, 4
          %s209 = int_to_ptr.vmem [resolvable:$true] %s208
          %214 = dma.hbm_to_vmem [thread:$0]  %s207, 2048, %s209, %s196, 128, 128, 8
        $region32: #{tpu_custom_call.1} parent=27 // pred_fallthru
          _
      $region28: #{tpu_custom_call.1} parent=5 // pred_fallthru
        _
      %p215 = scmp.le.s32.totalorder 1, %s18
      %p216 = scmp.lt.s32.totalorder %s18, 3
      %p217 = pnand %p215, %p216
      %p218 = pneg %p217
      // Predicated region
      $region33: #{tpu_custom_call.1} parent=5 // pred_check
        _
      $region34: #{tpu_custom_call.1} parent=5 // pred_check_branch
        %220 = sbr.rel (%p217) target = $region36
      $region35: #{tpu_custom_call.1} parent=5 // pred_region
        %s221 = ssub.s32 %s18, 1
        %s222 = sand.u32 %s31, 1
        %s223 = scalar_lea.sflag [#allocation4], %s222
        %s224 = sand.u32 %s31, 1
        %s225 = smul.addr %s224, 128
        %s226 = scalar_lea.vmem [#allocation3], %s225
        // Predicated region
        $region37: #{tpu_custom_call.1} parent=35 // pred_check
          %p227 = pneg %p44
        $region38: #{tpu_custom_call.1} parent=35 // pred_check_branch
          %229 = sbr.rel (%p227) target = $region40
        $region39: #{tpu_custom_call.1} parent=35 // pred_region
          %231 = dma.done %s223, 2048
        $region40: #{tpu_custom_call.1} parent=35 // pred_fallthru
          _
        // Predicated region
        $region41: #{tpu_custom_call.1} parent=35 // pred_check
          %p232 = pneg %p65
        $region42: #{tpu_custom_call.1} parent=35 // pred_check_branch
          %234 = sbr.rel (%p232) target = $region44
        $region43: #{tpu_custom_call.1} parent=35 // pred_region
          %236 = dma.done [#allocation7], 3072
        $region44: #{tpu_custom_call.1} parent=35 // pred_fallthru
          _
        // Predicated region
        $region45: #{tpu_custom_call.1} parent=35 // pred_check
          %p237 = pneg %p86
        $region46: #{tpu_custom_call.1} parent=35 // pred_check_branch
          %239 = sbr.rel (%p237) target = $region48
        $region47: #{tpu_custom_call.1} parent=35 // pred_region
          %241 = dma.done [#allocation7], 3072
        $region48: #{tpu_custom_call.1} parent=35 // pred_fallthru
          _
        // Predicated region
        $region49: #{tpu_custom_call.1} parent=35 // pred_check
          %p242 = pneg %p107
        $region50: #{tpu_custom_call.1} parent=35 // pred_check_branch
          %244 = sbr.rel (%p242) target = $region52
        $region51: #{tpu_custom_call.1} parent=35 // pred_region
          %246 = dma.done [#allocation10], 64
        $region52: #{tpu_custom_call.1} parent=35 // pred_fallthru
          _
        %s247 = sand.u32 %s31, 1
        %s248 = scalar_lea.sflag [#allocation4], %s247
        %s249 = sand.u32 %s31, 1
        %s250 = smul.addr %s249, 128
        %s251 = scalar_lea.vmem [#allocation3], %s250
        %p252 = pneg %p44
        %p253 = pneg %p41
        %p254 = pneg %p65
        %p255 = pneg %p62
        %p256 = pneg %p86
        %p257 = pneg %p83
        %p258 = pneg %p107
        %p259 = pneg %p104
        %p260 = pneg %p133
        %p261 = pneg %p130
        %s262 = sand.u32 %s120, 1
        %s263 = scalar_lea.sflag [#allocation5], %s262
        %s264 = sand.u32 %s120, 1
        %s265 = smul.addr %s264, 128
        %s266 = scalar_lea.vmem [#allocation11], %s265
        %s267 = smul.u32 8, %s23
        %s268 = smul.u32 8, %s23
        %270 = vst [vmem:[#allocation2] sm:$0xf] 0
        %271 = vst [vmem:[#allocation2 + $0x4] sm:$0xf] 0
        %272 = vst [vmem:[#allocation2 + $0x8] sm:$0xf] 0
        %273 = vst [vmem:[#allocation2 + $0xc] sm:$0xf] 0
        %274 = vst [vmem:[#allocation2 + $0x10] sm:$0xf] 0
        %275 = vst [vmem:[#allocation2 + $0x14] sm:$0xf] 0
        %276 = vst [vmem:[#allocation2 + $0x18] sm:$0xf] 0
        %277 = vst [vmem:[#allocation2 + $0x1c] sm:$0xf] 0
        %278 = vst [vmem:[#allocation2 + $0x20] sm:$0xf] 0
        %279 = vst [vmem:[#allocation2 + $0x24] sm:$0xf] 0
        %280 = vst [vmem:[#allocation2 + $0x28] sm:$0xf] 0
        %281 = vst [vmem:[#allocation2 + $0x2c] sm:$0xf] 0
        %282 = vst [vmem:[#allocation2 + $0x30] sm:$0xf] 0
        %283 = vst [vmem:[#allocation2 + $0x34] sm:$0xf] 0
        %284 = vst [vmem:[#allocation2 + $0x38] sm:$0xf] 0
        %285 = vst [vmem:[#allocation2 + $0x3c] sm:$0xf] 0
        %286 = vst [vmem:[#allocation2 + $0x40] sm:$0xf] 0
        %287 = vst [vmem:[#allocation2 + $0x44] sm:$0xf] 0
        %v288 = vld [vmem:[%s226] sm:$0xff]
        %v289 = vld [vmem:[%s226 + $0x8] sm:$0xff]
        %v290 = vpack.c.bf16 %v288, %v288
        %v291 = vpack.c.bf16 %v289, %v289
        %vm292 = vsmask.f32 256
        %vm293 = vsmask.f32 4368
        %vm294 = vmor %vm292, %vm293
        %v296 = vshrl.u32 %v290, 16
        %v298 = vrot.slane %v296, 7
        %v299 = vshll.u32 %v290, 16
        %v301 = vor.u32 %v298, %v299
        %v302 = vrot.slane %v298, 4
        %v304 = vshrl.u32 %v291, 16
        %v306 = vrot.slane %v304, 7
        %v307 = vshll.u32 %v291, 16
        %v309 = vor.u32 %v306, %v307
        %v310 = vsel %vm294, %v302, %v309
        %v311 = vrot.slane %v306, 4
        %vm315 = vcmask 1043456
        %vm316 = vsmask.f32 7938
        %vm317 = vmand %vm315, %vm316
        %v318 = vld [vmem:[#allocation2] sm:$0xf]
        %v319 = vsel %vm317, %v301, %v318
        %320 = vst [vmem:[#allocation2] sm:$0xf] %v319
        %321 = vst [vmem:[#allocation2 + $0x4] sm:$0xf] %v310
        %vm322 = vcmask 1040384
        %vm323 = vmand %vm322, %vm292
        %v324 = vld [vmem:[#allocation2 + $0x8] sm:$0x1]
        %v325 = vsel %vm323, %v311, %v324
        %326 = vst [vmem:[#allocation2 + $0x8] sm:$0x1] %v325
        %s327 = scalar_lea.vmem %s226, 16 [#allocation3]
        %v328 = vld [vmem:[%s327] sm:$0xff]
        %v329 = vld [vmem:[%s327 + $0x8] sm:$0xff]
        %v330 = vpack.c.bf16 %v328, %v328
        %v331 = vpack.c.bf16 %v329, %v329
        %vm332 = vsmask.f32 1280
        %vm333 = vsmask.f32 5392
        %vm334 = vmor %vm332, %vm333
        %v336 = vshrl.u32 %v330, 16
        %v338 = vrot.slane %v336, 6
        %v339 = vshll.u32 %v330, 16
        %v341 = vrot.slane %v339, 7
        %v342 = vor.u32 %v338, %v341
        %v343 = vrot.slane %v342, 4
        %v345 = vshrl.u32 %v331, 16
        %v347 = vrot.slane %v345, 6
        %v348 = vshll.u32 %v331, 16
        %v350 = vrot.slane %v348, 7
        %v351 = vor.u32 %v347, %v350
        %v352 = vsel %vm334, %v343, %v351
        %v353 = vrot.slane %v351, 4
        %vm357 = vcmask 1043457
        %vm358 = vsmask.f32 7942
        %vm359 = vmand %vm357, %vm358
        %v360 = vld [vmem:[#allocation2 + $0x8] sm:$0xe]
        %v361 = vsel %vm359, %v342, %v360
        %362 = vst [vmem:[#allocation2 + $0x8] sm:$0xe] %v361
        %363 = vst [vmem:[#allocation2 + $0xc] sm:$0xf] %v352
        %vm364 = vcmask 1041408
        %vm365 = vmand %vm364, %vm332
        %v366 = vld [vmem:[#allocation2 + $0x10] sm:$0x3]
        %v367 = vsel %vm365, %v353, %v366
        %368 = vst [vmem:[#allocation2 + $0x10] sm:$0x3] %v367
        %s369 = scalar_lea.vmem %s226, 32 [#allocation3]
        %v370 = vld [vmem:[%s369] sm:$0xff]
        %v371 = vld [vmem:[%s369 + $0x8] sm:$0xff]
        %v372 = vpack.c.bf16 %v370, %v370
        %v373 = vpack.c.bf16 %v371, %v371
        %vm374 = vsmask.f32 2304
        %vm375 = vsmask.f32 6416
        %vm376 = vmor %vm374, %vm375
        %v378 = vshrl.u32 %v372, 16
        %v380 = vrot.slane %v378, 5
        %v381 = vshll.u32 %v372, 16
        %v383 = vrot.slane %v381, 6
        %v384 = vor.u32 %v380, %v383
        %v385 = vrot.slane %v384, 4
        %v387 = vshrl.u32 %v373, 16
        %v389 = vrot.slane %v387, 5
        %v390 = vshll.u32 %v373, 16
        %v392 = vrot.slane %v390, 6
        %v393 = vor.u32 %v389, %v392
        %v394 = vsel %vm376, %v385, %v393
        %v395 = vrot.slane %v393, 4
        %vm399 = vcmask 1043458
        %vm400 = vsmask.f32 7946
        %vm401 = vmand %vm399, %vm400
        %v402 = vld [vmem:[#allocation2 + $0x10] sm:$0xc]
        %v403 = vsel %vm401, %v384, %v402
        %404 = vst [vmem:[#allocation2 + $0x10] sm:$0xc] %v403
        %405 = vst [vmem:[#allocation2 + $0x14] sm:$0xf] %v394
        %vm406 = vcmask 1042432
        %vm407 = vmand %vm406, %vm374
        %v408 = vld [vmem:[#allocation2 + $0x18] sm:$0x7]
        %v409 = vsel %vm407, %v395, %v408
        %410 = vst [vmem:[#allocation2 + $0x18] sm:$0x7] %v409
        %s411 = scalar_lea.vmem %s226, 48 [#allocation3]
        %v412 = vld [vmem:[%s411] sm:$0xff]
        %v413 = vld [vmem:[%s411 + $0x8] sm:$0xff]
        %v414 = vpack.c.bf16 %v412, %v412
        %v415 = vpack.c.bf16 %v413, %v413
        %vm416 = vsmask.f32 3328
        %vm417 = vsmask.f32 7440
        %vm418 = vmor %vm416, %vm417
        %v420 = vshll.u32 %v414, 16
        %v422 = vrot.slane %v420, 5
        %v423 = vshrl.u32 %v414, 16
        %v425 = vrot.slane %v423, 4
        %v426 = vor.u32 %v425, %v422
        %v427 = vrot.slane %v426, 4
        %v429 = vshll.u32 %v415, 16
        %v431 = vrot.slane %v429, 5
        %v432 = vsel %vm418, %v427, %v431
        %v433 = vshrl.u32 %v415, 16
        %v435 = vrot.slane %v433, 4
        %v436 = vor.u32 %v435, %v431
        %v437 = vrot.slane %v436, 4
        %vm441 = vcmask 1043459
        %vm442 = vsmask.f32 7950
        %vm443 = vmand %vm441, %vm442
        %v444 = vld [vmem:[#allocation2 + $0x18] sm:$0x8]
        %v445 = vsel %vm443, %v422, %v444
        %446 = vst [vmem:[#allocation2 + $0x18] sm:$0x8] %v445
        %447 = vst [vmem:[#allocation2 + $0x1c] sm:$0xf] %v432
        %vm448 = vmand %vm315, %vm416
        %v449 = vld [vmem:[#allocation2 + $0x20] sm:$0xf]
        %v450 = vsel %vm448, %v437, %v449
        %451 = vst [vmem:[#allocation2 + $0x20] sm:$0xf] %v450
        %s452 = scalar_lea.vmem %s226, 64 [#allocation3]
        %v453 = vld [vmem:[%s452] sm:$0xff]
        %v454 = vld [vmem:[%s452 + $0x8] sm:$0xff]
        %v455 = vpack.c.bf16 %v453, %v453
        %v456 = vpack.c.bf16 %v454, %v454
        %v458 = vshrl.u32 %v455, 16
        %v460 = vrot.slane %v458, 7
        %v461 = vshll.u32 %v455, 16
        %v463 = vor.u32 %v460, %v461
        %v464 = vrot.slane %v460, 4
        %v466 = vshrl.u32 %v456, 16
        %v468 = vrot.slane %v466, 7
        %v469 = vshll.u32 %v456, 16
        %v471 = vor.u32 %v468, %v469
        %v472 = vsel %vm294, %v464, %v471
        %v473 = vrot.slane %v468, 4
        %v477 = vld [vmem:[#allocation2 + $0x24] sm:$0xf]
        %v478 = vsel %vm317, %v463, %v477
        %479 = vst [vmem:[#allocation2 + $0x24] sm:$0xf] %v478
        %480 = vst [vmem:[#allocation2 + $0x28] sm:$0xf] %v472
        %v481 = vld [vmem:[#allocation2 + $0x2c] sm:$0x1]
        %v482 = vsel %vm323, %v473, %v481
        %483 = vst [vmem:[#allocation2 + $0x2c] sm:$0x1] %v482
        %s484 = scalar_lea.vmem %s226, 80 [#allocation3]
        %v485 = vld [vmem:[%s484] sm:$0xff]
        %v486 = vld [vmem:[%s484 + $0x8] sm:$0xff]
        %v487 = vpack.c.bf16 %v485, %v485
        %v488 = vpack.c.bf16 %v486, %v486
        %v490 = vshrl.u32 %v487, 16
        %v492 = vrot.slane %v490, 6
        %v493 = vshll.u32 %v487, 16
        %v495 = vrot.slane %v493, 7
        %v496 = vor.u32 %v492, %v495
        %v497 = vrot.slane %v496, 4
        %v499 = vshrl.u32 %v488, 16
        %v501 = vrot.slane %v499, 6
        %v502 = vshll.u32 %v488, 16
        %v504 = vrot.slane %v502, 7
        %v505 = vor.u32 %v501, %v504
        %v506 = vsel %vm334, %v497, %v505
        %v507 = vrot.slane %v505, 4
        %v511 = vld [vmem:[#allocation2 + $0x2c] sm:$0xe]
        %v512 = vsel %vm359, %v496, %v511
        %513 = vst [vmem:[#allocation2 + $0x2c] sm:$0xe] %v512
        %514 = vst [vmem:[#allocation2 + $0x30] sm:$0xf] %v506
        %v515 = vld [vmem:[#allocation2 + $0x34] sm:$0x3]
        %v516 = vsel %vm365, %v507, %v515
        %517 = vst [vmem:[#allocation2 + $0x34] sm:$0x3] %v516
        %s518 = scalar_lea.vmem %s226, 96 [#allocation3]
        %v519 = vld [vmem:[%s518] sm:$0xff]
        %v520 = vld [vmem:[%s518 + $0x8] sm:$0xff]
        %v521 = vpack.c.bf16 %v519, %v519
        %v522 = vpack.c.bf16 %v520, %v520
        %v524 = vshrl.u32 %v521, 16
        %v526 = vrot.slane %v524, 5
        %v527 = vshll.u32 %v521, 16
        %v529 = vrot.slane %v527, 6
        %v530 = vor.u32 %v526, %v529
        %v531 = vrot.slane %v530, 4
        %v533 = vshrl.u32 %v522, 16
        %v535 = vrot.slane %v533, 5
        %v536 = vshll.u32 %v522, 16
        %v538 = vrot.slane %v536, 6
        %v539 = vor.u32 %v535, %v538
        %v540 = vsel %vm376, %v531, %v539
        %v541 = vrot.slane %v539, 4
        %v545 = vld [vmem:[#allocation2 + $0x34] sm:$0xc]
        %v546 = vsel %vm401, %v530, %v545
        %547 = vst [vmem:[#allocation2 + $0x34] sm:$0xc] %v546
        %548 = vst [vmem:[#allocation2 + $0x38] sm:$0xf] %v540
        %v549 = vld [vmem:[#allocation2 + $0x3c] sm:$0x7]
        %v550 = vsel %vm407, %v541, %v549
        %551 = vst [vmem:[#allocation2 + $0x3c] sm:$0x7] %v550
        %s552 = scalar_lea.vmem %s226, 112 [#allocation3]
        %v553 = vld [vmem:[%s552] sm:$0xff]
        %v554 = vld [vmem:[%s552 + $0x8] sm:$0xff]
        %v555 = vpack.c.bf16 %v553, %v553
        %v556 = vpack.c.bf16 %v554, %v554
        %v558 = vshll.u32 %v555, 16
        %v560 = vrot.slane %v558, 5
        %v561 = vshrl.u32 %v555, 16
        %v563 = vrot.slane %v561, 4
        %v564 = vor.u32 %v563, %v560
        %v565 = vrot.slane %v564, 4
        %v567 = vshll.u32 %v556, 16
        %v569 = vrot.slane %v567, 5
        %v570 = vsel %vm418, %v565, %v569
        %v571 = vshrl.u32 %v556, 16
        %v573 = vrot.slane %v571, 4
        %v574 = vor.u32 %v573, %v569
        %v575 = vrot.slane %v574, 4
        %v579 = vld [vmem:[#allocation2 + $0x3c] sm:$0x8]
        %v580 = vsel %vm443, %v560, %v579
        %581 = vst [vmem:[#allocation2 + $0x3c] sm:$0x8] %v580
        %582 = vst [vmem:[#allocation2 + $0x40] sm:$0xf] %v570
        %v583 = vld [vmem:[#allocation2 + $0x44] sm:$0xf]
        %v584 = vsel %vm448, %v575, %v583
        %585 = vst [vmem:[#allocation2 + $0x44] sm:$0xf] %v584
        %v586 = vlaneseq
        %v587 = vshrl.u32 %v586, 7
        %v588 = vadd.s32 %v587, 8
        %v589 = vadd.s32 %v587, 16
        %v590 = vadd.s32 %v587, 24
        %v591 = vadd.s32 %v587, 32
        %v592 = vadd.s32 %v587, 40
        %v593 = vadd.s32 %v587, 48
        %v594 = vadd.s32 %v587, 56
        %v595 = vadd.s32 %v587, 64
        %v596 = vadd.s32 %v587, 72
        %v597 = vadd.s32 %v587, 80
        %v598 = vadd.s32 %v587, 88
        %v599 = vadd.s32 %v587, 96
        %v600 = vadd.s32 %v587, 104
        %v601 = vadd.s32 %v587, 112
        %v602 = vadd.s32 %v587, 120
        %v603 = vadd.s32 %v587, 128
        %v604 = vadd.s32 %v587, 136
        %vm605 = vcmp.lt.s32.totalorder %v587, 0
        %v606 = vsub.s32 0, %v587
        %v607 = vsel %vm605, %v606, %v587
        %v608 = vand.u32 %v607, 65535
        %v609 = vshrl.u32 %v607, 16
        %v611 = vmul.u32 %v608, 14564
        %v612 = vmul.u32 %v608, 58254
        %v613 = vmul.u32 %v609, 14564
        %v614 = vmul.u32 %v609, 58254
        %v615 = vshll.u32 %v612, 16
        %v616 = vshrl.u32 %v612, 16
        %v617 = vshll.u32 %v613, 16
        %v618 = vshrl.u32 %v613, 16
        %vm619 = vc.u32 %v611, %v615
        %v620 = vsel %vm619, 1, 0
        %v621 = vadd.s32 %v611, %v615
        %v622 = vadd.s32 %v614, %v620
        %vm623 = vc.u32 %v621, %v617
        %v624 = vsel %vm623, 1, 0
        %v625 = vadd.s32 %v621, %v617
        %v626 = vadd.s32 %v622, %v624
        %v627 = vadd.s32 %v626, %v616
        %v628 = vadd.s32 %v627, %v618
        %v629 = vshrl.u32 %v628, 4
        %v630 = vmul.u32 %v629, 18
        %v631 = vsub.s32 %v607, %v630
        %v632 = vsub.s32 0, %v631
        %v633 = vsel %vm605, %v632, %v631
        %vm634 = vcmp.lt.s32.totalorder %v588, 0
        %v635 = vsub.s32 0, %v588
        %v636 = vsel %vm634, %v635, %v588
        %v637 = vand.u32 %v636, 65535
        %v638 = vshrl.u32 %v636, 16
        %v640 = vmul.u32 %v637, 14564
        %v641 = vmul.u32 %v637, 58254
        %v642 = vmul.u32 %v638, 14564
        %v643 = vmul.u32 %v638, 58254
        %v644 = vshll.u32 %v641, 16
        %v645 = vshrl.u32 %v641, 16
        %v646 = vshll.u32 %v642, 16
        %v647 = vshrl.u32 %v642, 16
        %vm648 = vc.u32 %v640, %v644
        %v649 = vsel %vm648, 1, 0
        %v650 = vadd.s32 %v640, %v644
        %v651 = vadd.s32 %v643, %v649
        %vm652 = vc.u32 %v650, %v646
        %v653 = vsel %vm652, 1, 0
        %v654 = vadd.s32 %v650, %v646
        %v655 = vadd.s32 %v651, %v653
        %v656 = vadd.s32 %v655, %v645
        %v657 = vadd.s32 %v656, %v647
        %v658 = vshrl.u32 %v657, 4
        %v659 = vmul.u32 %v658, 18
        %v660 = vsub.s32 %v636, %v659
        %v661 = vsub.s32 0, %v660
        %v662 = vsel %vm634, %v661, %v660
        %vm663 = vcmp.lt.s32.totalorder %v589, 0
        %v664 = vsub.s32 0, %v589
        %v665 = vsel %vm663, %v664, %v589
        %v666 = vand.u32 %v665, 65535
        %v667 = vshrl.u32 %v665, 16
        %v669 = vmul.u32 %v666, 14564
        %v670 = vmul.u32 %v666, 58254
        %v671 = vmul.u32 %v667, 14564
        %v672 = vmul.u32 %v667, 58254
        %v673 = vshll.u32 %v670, 16
        %v674 = vshrl.u32 %v670, 16
        %v675 = vshll.u32 %v671, 16
        %v676 = vshrl.u32 %v671, 16
        %vm677 = vc.u32 %v669, %v673
        %v678 = vsel %vm677, 1, 0
        %v679 = vadd.s32 %v669, %v673
        %v680 = vadd.s32 %v672, %v678
        %vm681 = vc.u32 %v679, %v675
        %v682 = vsel %vm681, 1, 0
        %v683 = vadd.s32 %v679, %v675
        %v684 = vadd.s32 %v680, %v682
        %v685 = vadd.s32 %v684, %v674
        %v686 = vadd.s32 %v685, %v676
        %v687 = vshrl.u32 %v686, 4
        %v688 = vmul.u32 %v687, 18
        %v689 = vsub.s32 %v665, %v688
        %v690 = vsub.s32 0, %v689
        %v691 = vsel %vm663, %v690, %v689
        %vm692 = vcmp.lt.s32.totalorder %v590, 0
        %v693 = vsub.s32 0, %v590
        %v694 = vsel %vm692, %v693, %v590
        %v695 = vand.u32 %v694, 65535
        %v696 = vshrl.u32 %v694, 16
        %v698 = vmul.u32 %v695, 14564
        %v699 = vmul.u32 %v695, 58254
        %v700 = vmul.u32 %v696, 14564
        %v701 = vmul.u32 %v696, 58254
        %v702 = vshll.u32 %v699, 16
        %v703 = vshrl.u32 %v699, 16
        %v704 = vshll.u32 %v700, 16
        %v705 = vshrl.u32 %v700, 16
        %vm706 = vc.u32 %v698, %v702
        %v707 = vsel %vm706, 1, 0
        %v708 = vadd.s32 %v698, %v702
        %v709 = vadd.s32 %v701, %v707
        %vm710 = vc.u32 %v708, %v704
        %v711 = vsel %vm710, 1, 0
        %v712 = vadd.s32 %v708, %v704
        %v713 = vadd.s32 %v709, %v711
        %v714 = vadd.s32 %v713, %v703
        %v715 = vadd.s32 %v714, %v705
        %v716 = vshrl.u32 %v715, 4
        %v717 = vmul.u32 %v716, 18
        %v718 = vsub.s32 %v694, %v717
        %v719 = vsub.s32 0, %v718
        %v720 = vsel %vm692, %v719, %v718
        %vm721 = vcmp.lt.s32.totalorder %v591, 0
        %v722 = vsub.s32 0, %v591
        %v723 = vsel %vm721, %v722, %v591
        %v724 = vand.u32 %v723, 65535
        %v725 = vshrl.u32 %v723, 16
        %v727 = vmul.u32 %v724, 14564
        %v728 = vmul.u32 %v724, 58254
        %v729 = vmul.u32 %v725, 14564
        %v730 = vmul.u32 %v725, 58254
        %v731 = vshll.u32 %v728, 16
        %v732 = vshrl.u32 %v728, 16
        %v733 = vshll.u32 %v729, 16
        %v734 = vshrl.u32 %v729, 16
        %vm735 = vc.u32 %v727, %v731
        %v736 = vsel %vm735, 1, 0
        %v737 = vadd.s32 %v727, %v731
        %v738 = vadd.s32 %v730, %v736
        %vm739 = vc.u32 %v737, %v733
        %v740 = vsel %vm739, 1, 0
        %v741 = vadd.s32 %v737, %v733
        %v742 = vadd.s32 %v738, %v740
        %v743 = vadd.s32 %v742, %v732
        %v744 = vadd.s32 %v743, %v734
        %v745 = vshrl.u32 %v744, 4
        %v746 = vmul.u32 %v745, 18
        %v747 = vsub.s32 %v723, %v746
        %v748 = vsub.s32 0, %v747
        %v749 = vsel %vm721, %v748, %v747
        %vm750 = vcmp.lt.s32.totalorder %v592, 0
        %v751 = vsub.s32 0, %v592
        %v752 = vsel %vm750, %v751, %v592
        %v753 = vand.u32 %v752, 65535
        %v754 = vshrl.u32 %v752, 16
        %v756 = vmul.u32 %v753, 14564
        %v757 = vmul.u32 %v753, 58254
        %v758 = vmul.u32 %v754, 14564
        %v759 = vmul.u32 %v754, 58254
        %v760 = vshll.u32 %v757, 16
        %v761 = vshrl.u32 %v757, 16
        %v762 = vshll.u32 %v758, 16
        %v763 = vshrl.u32 %v758, 16
        %vm764 = vc.u32 %v756, %v760
        %v765 = vsel %vm764, 1, 0
        %v766 = vadd.s32 %v756, %v760
        %v767 = vadd.s32 %v759, %v765
        %vm768 = vc.u32 %v766, %v762
        %v769 = vsel %vm768, 1, 0
        %v770 = vadd.s32 %v766, %v762
        %v771 = vadd.s32 %v767, %v769
        %v772 = vadd.s32 %v771, %v761
        %v773 = vadd.s32 %v772, %v763
        %v774 = vshrl.u32 %v773, 4
        %v775 = vmul.u32 %v774, 18
        %v776 = vsub.s32 %v752, %v775
        %v777 = vsub.s32 0, %v776
        %v778 = vsel %vm750, %v777, %v776
        %vm779 = vcmp.lt.s32.totalorder %v593, 0
        %v780 = vsub.s32 0, %v593
        %v781 = vsel %vm779, %v780, %v593
        %v782 = vand.u32 %v781, 65535
        %v783 = vshrl.u32 %v781, 16
        %v785 = vmul.u32 %v782, 14564
        %v786 = vmul.u32 %v782, 58254
        %v787 = vmul.u32 %v783, 14564
        %v788 = vmul.u32 %v783, 58254
        %v789 = vshll.u32 %v786, 16
        %v790 = vshrl.u32 %v786, 16
        %v791 = vshll.u32 %v787, 16
        %v792 = vshrl.u32 %v787, 16
        %vm793 = vc.u32 %v785, %v789
        %v794 = vsel %vm793, 1, 0
        %v795 = vadd.s32 %v785, %v789
        %v796 = vadd.s32 %v788, %v794
        %vm797 = vc.u32 %v795, %v791
        %v798 = vsel %vm797, 1, 0
        %v799 = vadd.s32 %v795, %v791
        %v800 = vadd.s32 %v796, %v798
        %v801 = vadd.s32 %v800, %v790
        %v802 = vadd.s32 %v801, %v792
        %v803 = vshrl.u32 %v802, 4
        %v804 = vmul.u32 %v803, 18
        %v805 = vsub.s32 %v781, %v804
        %v806 = vsub.s32 0, %v805
        %v807 = vsel %vm779, %v806, %v805
        %vm808 = vcmp.lt.s32.totalorder %v594, 0
        %v809 = vsub.s32 0, %v594
        %v810 = vsel %vm808, %v809, %v594
        %v811 = vand.u32 %v810, 65535
        %v812 = vshrl.u32 %v810, 16
        %v814 = vmul.u32 %v811, 14564
        %v815 = vmul.u32 %v811, 58254
        %v816 = vmul.u32 %v812, 14564
        %v817 = vmul.u32 %v812, 58254
        %v818 = vshll.u32 %v815, 16
        %v819 = vshrl.u32 %v815, 16
        %v820 = vshll.u32 %v816, 16
        %v821 = vshrl.u32 %v816, 16
        %vm822 = vc.u32 %v814, %v818
        %v823 = vsel %vm822, 1, 0
        %v824 = vadd.s32 %v814, %v818
        %v825 = vadd.s32 %v817, %v823
        %vm826 = vc.u32 %v824, %v820
        %v827 = vsel %vm826, 1, 0
        %v828 = vadd.s32 %v824, %v820
        %v829 = vadd.s32 %v825, %v827
        %v830 = vadd.s32 %v829, %v819
        %v831 = vadd.s32 %v830, %v821
        %v832 = vshrl.u32 %v831, 4
        %v833 = vmul.u32 %v832, 18
        %v834 = vsub.s32 %v810, %v833
        %v835 = vsub.s32 0, %v834
        %v836 = vsel %vm808, %v835, %v834
        %vm837 = vcmp.lt.s32.totalorder %v595, 0
        %v838 = vsub.s32 0, %v595
        %v839 = vsel %vm837, %v838, %v595
        %v840 = vand.u32 %v839, 65535
        %v841 = vshrl.u32 %v839, 16
        %v843 = vmul.u32 %v840, 14564
        %v844 = vmul.u32 %v840, 58254
        %v845 = vmul.u32 %v841, 14564
        %v846 = vmul.u32 %v841, 58254
        %v847 = vshll.u32 %v844, 16
        %v848 = vshrl.u32 %v844, 16
        %v849 = vshll.u32 %v845, 16
        %v850 = vshrl.u32 %v845, 16
        %vm851 = vc.u32 %v843, %v847
        %v852 = vsel %vm851, 1, 0
        %v853 = vadd.s32 %v843, %v847
        %v854 = vadd.s32 %v846, %v852
        %vm855 = vc.u32 %v853, %v849
        %v856 = vsel %vm855, 1, 0
        %v857 = vadd.s32 %v853, %v849
        %v858 = vadd.s32 %v854, %v856
        %v859 = vadd.s32 %v858, %v848
        %v860 = vadd.s32 %v859, %v850
        %v861 = vshrl.u32 %v860, 4
        %v862 = vmul.u32 %v861, 18
        %v863 = vsub.s32 %v839, %v862
        %v864 = vsub.s32 0, %v863
        %v865 = vsel %vm837, %v864, %v863
        %vm866 = vcmp.lt.s32.totalorder %v596, 0
        %v867 = vsub.s32 0, %v596
        %v868 = vsel %vm866, %v867, %v596
        %v869 = vand.u32 %v868, 65535
        %v870 = vshrl.u32 %v868, 16
        %v872 = vmul.u32 %v869, 14564
        %v873 = vmul.u32 %v869, 58254
        %v874 = vmul.u32 %v870, 14564
        %v875 = vmul.u32 %v870, 58254
        %v876 = vshll.u32 %v873, 16
        %v877 = vshrl.u32 %v873, 16
        %v878 = vshll.u32 %v874, 16
        %v879 = vshrl.u32 %v874, 16
        %vm880 = vc.u32 %v872, %v876
        %v881 = vsel %vm880, 1, 0
        %v882 = vadd.s32 %v872, %v876
        %v883 = vadd.s32 %v875, %v881
        %vm884 = vc.u32 %v882, %v878
        %v885 = vsel %vm884, 1, 0
        %v886 = vadd.s32 %v882, %v878
        %v887 = vadd.s32 %v883, %v885
        %v888 = vadd.s32 %v887, %v877
        %v889 = vadd.s32 %v888, %v879
        %v890 = vshrl.u32 %v889, 4
        %v891 = vmul.u32 %v890, 18
        %v892 = vsub.s32 %v868, %v891
        %v893 = vsub.s32 0, %v892
        %v894 = vsel %vm866, %v893, %v892
        %vm895 = vcmp.lt.s32.totalorder %v597, 0
        %v896 = vsub.s32 0, %v597
        %v897 = vsel %vm895, %v896, %v597
        %v898 = vand.u32 %v897, 65535
        %v899 = vshrl.u32 %v897, 16
        %v901 = vmul.u32 %v898, 14564
        %v902 = vmul.u32 %v898, 58254
        %v903 = vmul.u32 %v899, 14564
        %v904 = vmul.u32 %v899, 58254
        %v905 = vshll.u32 %v902, 16
        %v906 = vshrl.u32 %v902, 16
        %v907 = vshll.u32 %v903, 16
        %v908 = vshrl.u32 %v903, 16
        %vm909 = vc.u32 %v901, %v905
        %v910 = vsel %vm909, 1, 0
        %v911 = vadd.s32 %v901, %v905
        %v912 = vadd.s32 %v904, %v910
        %vm913 = vc.u32 %v911, %v907
        %v914 = vsel %vm913, 1, 0
        %v915 = vadd.s32 %v911, %v907
        %v916 = vadd.s32 %v912, %v914
        %v917 = vadd.s32 %v916, %v906
        %v918 = vadd.s32 %v917, %v908
        %v919 = vshrl.u32 %v918, 4
        %v920 = vmul.u32 %v919, 18
        %v921 = vsub.s32 %v897, %v920
        %v922 = vsub.s32 0, %v921
        %v923 = vsel %vm895, %v922, %v921
        %vm924 = vcmp.lt.s32.totalorder %v598, 0
        %v925 = vsub.s32 0, %v598
        %v926 = vsel %vm924, %v925, %v598
        %v927 = vand.u32 %v926, 65535
        %v928 = vshrl.u32 %v926, 16
        %v930 = vmul.u32 %v927, 14564
        %v931 = vmul.u32 %v927, 58254
        %v932 = vmul.u32 %v928, 14564
        %v933 = vmul.u32 %v928, 58254
        %v934 = vshll.u32 %v931, 16
        %v935 = vshrl.u32 %v931, 16
        %v936 = vshll.u32 %v932, 16
        %v937 = vshrl.u32 %v932, 16
        %vm938 = vc.u32 %v930, %v934
        %v939 = vsel %vm938, 1, 0
        %v940 = vadd.s32 %v930, %v934
        %v941 = vadd.s32 %v933, %v939
        %vm942 = vc.u32 %v940, %v936
        %v943 = vsel %vm942, 1, 0
        %v944 = vadd.s32 %v940, %v936
        %v945 = vadd.s32 %v941, %v943
        %v946 = vadd.s32 %v945, %v935
        %v947 = vadd.s32 %v946, %v937
        %v948 = vshrl.u32 %v947, 4
        %v949 = vmul.u32 %v948, 18
        %v950 = vsub.s32 %v926, %v949
        %v951 = vsub.s32 0, %v950
        %v952 = vsel %vm924, %v951, %v950
        %vm953 = vcmp.lt.s32.totalorder %v599, 0
        %v954 = vsub.s32 0, %v599
        %v955 = vsel %vm953, %v954, %v599
        %v956 = vand.u32 %v955, 65535
        %v957 = vshrl.u32 %v955, 16
        %v959 = vmul.u32 %v956, 14564
        %v960 = vmul.u32 %v956, 58254
        %v961 = vmul.u32 %v957, 14564
        %v962 = vmul.u32 %v957, 58254
        %v963 = vshll.u32 %v960, 16
        %v964 = vshrl.u32 %v960, 16
        %v965 = vshll.u32 %v961, 16
        %v966 = vshrl.u32 %v961, 16
        %vm967 = vc.u32 %v959, %v963
        %v968 = vsel %vm967, 1, 0
        %v969 = vadd.s32 %v959, %v963
        %v970 = vadd.s32 %v962, %v968
        %vm971 = vc.u32 %v969, %v965
        %v972 = vsel %vm971, 1, 0
        %v973 = vadd.s32 %v969, %v965
        %v974 = vadd.s32 %v970, %v972
        %v975 = vadd.s32 %v974, %v964
        %v976 = vadd.s32 %v975, %v966
        %v977 = vshrl.u32 %v976, 4
        %v978 = vmul.u32 %v977, 18
        %v979 = vsub.s32 %v955, %v978
        %v980 = vsub.s32 0, %v979
        %v981 = vsel %vm953, %v980, %v979
        %vm982 = vcmp.lt.s32.totalorder %v600, 0
        %v983 = vsub.s32 0, %v600
        %v984 = vsel %vm982, %v983, %v600
        %v985 = vand.u32 %v984, 65535
        %v986 = vshrl.u32 %v984, 16
        %v988 = vmul.u32 %v985, 14564
        %v989 = vmul.u32 %v985, 58254
        %v990 = vmul.u32 %v986, 14564
        %v991 = vmul.u32 %v986, 58254
        %v992 = vshll.u32 %v989, 16
        %v993 = vshrl.u32 %v989, 16
        %v994 = vshll.u32 %v990, 16
        %v995 = vshrl.u32 %v990, 16
        %vm996 = vc.u32 %v988, %v992
        %v997 = vsel %vm996, 1, 0
        %v998 = vadd.s32 %v988, %v992
        %v999 = vadd.s32 %v991, %v997
        %vm1000 = vc.u32 %v998, %v994
        %v1001 = vsel %vm1000, 1, 0
        %v1002 = vadd.s32 %v998, %v994
        %v1003 = vadd.s32 %v999, %v1001
        %v1004 = vadd.s32 %v1003, %v993
        %v1005 = vadd.s32 %v1004, %v995
        %v1006 = vshrl.u32 %v1005, 4
        %v1007 = vmul.u32 %v1006, 18
        %v1008 = vsub.s32 %v984, %v1007
        %v1009 = vsub.s32 0, %v1008
        %v1010 = vsel %vm982, %v1009, %v1008
        %vm1011 = vcmp.lt.s32.totalorder %v601, 0
        %v1012 = vsub.s32 0, %v601
        %v1013 = vsel %vm1011, %v1012, %v601
        %v1014 = vand.u32 %v1013, 65535
        %v1015 = vshrl.u32 %v1013, 16
        %v1017 = vmul.u32 %v1014, 14564
        %v1018 = vmul.u32 %v1014, 58254
        %v1019 = vmul.u32 %v1015, 14564
        %v1020 = vmul.u32 %v1015, 58254
        %v1021 = vshll.u32 %v1018, 16
        %v1022 = vshrl.u32 %v1018, 16
        %v1023 = vshll.u32 %v1019, 16
        %v1024 = vshrl.u32 %v1019, 16
        %vm1025 = vc.u32 %v1017, %v1021
        %v1026 = vsel %vm1025, 1, 0
        %v1027 = vadd.s32 %v1017, %v1021
        %v1028 = vadd.s32 %v1020, %v1026
        %vm1029 = vc.u32 %v1027, %v1023
        %v1030 = vsel %vm1029, 1, 0
        %v1031 = vadd.s32 %v1027, %v1023
        %v1032 = vadd.s32 %v1028, %v1030
        %v1033 = vadd.s32 %v1032, %v1022
        %v1034 = vadd.s32 %v1033, %v1024
        %v1035 = vshrl.u32 %v1034, 4
        %v1036 = vmul.u32 %v1035, 18
        %v1037 = vsub.s32 %v1013, %v1036
        %v1038 = vsub.s32 0, %v1037
        %v1039 = vsel %vm1011, %v1038, %v1037
        %vm1040 = vcmp.lt.s32.totalorder %v602, 0
        %v1041 = vsub.s32 0, %v602
        %v1042 = vsel %vm1040, %v1041, %v602
        %v1043 = vand.u32 %v1042, 65535
        %v1044 = vshrl.u32 %v1042, 16
        %v1046 = vmul.u32 %v1043, 14564
        %v1047 = vmul.u32 %v1043, 58254
        %v1048 = vmul.u32 %v1044, 14564
        %v1049 = vmul.u32 %v1044, 58254
        %v1050 = vshll.u32 %v1047, 16
        %v1051 = vshrl.u32 %v1047, 16
        %v1052 = vshll.u32 %v1048, 16
        %v1053 = vshrl.u32 %v1048, 16
        %vm1054 = vc.u32 %v1046, %v1050
        %v1055 = vsel %vm1054, 1, 0
        %v1056 = vadd.s32 %v1046, %v1050
        %v1057 = vadd.s32 %v1049, %v1055
        %vm1058 = vc.u32 %v1056, %v1052
        %v1059 = vsel %vm1058, 1, 0
        %v1060 = vadd.s32 %v1056, %v1052
        %v1061 = vadd.s32 %v1057, %v1059
        %v1062 = vadd.s32 %v1061, %v1051
        %v1063 = vadd.s32 %v1062, %v1053
        %v1064 = vshrl.u32 %v1063, 4
        %v1065 = vmul.u32 %v1064, 18
        %v1066 = vsub.s32 %v1042, %v1065
        %v1067 = vsub.s32 0, %v1066
        %v1068 = vsel %vm1040, %v1067, %v1066
        %vm1069 = vcmp.lt.s32.totalorder %v603, 0
        %v1070 = vsub.s32 0, %v603
        %v1071 = vsel %vm1069, %v1070, %v603
        %v1072 = vand.u32 %v1071, 65535
        %v1073 = vshrl.u32 %v1071, 16
        %v1075 = vmul.u32 %v1072, 14564
        %v1076 = vmul.u32 %v1072, 58254
        %v1077 = vmul.u32 %v1073, 14564
        %v1078 = vmul.u32 %v1073, 58254
        %v1079 = vshll.u32 %v1076, 16
        %v1080 = vshrl.u32 %v1076, 16
        %v1081 = vshll.u32 %v1077, 16
        %v1082 = vshrl.u32 %v1077, 16
        %vm1083 = vc.u32 %v1075, %v1079
        %v1084 = vsel %vm1083, 1, 0
        %v1085 = vadd.s32 %v1075, %v1079
        %v1086 = vadd.s32 %v1078, %v1084
        %vm1087 = vc.u32 %v1085, %v1081
        %v1088 = vsel %vm1087, 1, 0
        %v1089 = vadd.s32 %v1085, %v1081
        %v1090 = vadd.s32 %v1086, %v1088
        %v1091 = vadd.s32 %v1090, %v1080
        %v1092 = vadd.s32 %v1091, %v1082
        %v1093 = vshrl.u32 %v1092, 4
        %v1094 = vmul.u32 %v1093, 18
        %v1095 = vsub.s32 %v1071, %v1094
        %v1096 = vsub.s32 0, %v1095
        %v1097 = vsel %vm1069, %v1096, %v1095
        %vm1098 = vcmp.lt.s32.totalorder %v604, 0
        %v1099 = vsub.s32 0, %v604
        %v1100 = vsel %vm1098, %v1099, %v604
        %v1101 = vand.u32 %v1100, 65535
        %v1102 = vshrl.u32 %v1100, 16
        %v1104 = vmul.u32 %v1101, 14564
        %v1105 = vmul.u32 %v1101, 58254
        %v1106 = vmul.u32 %v1102, 14564
        %v1107 = vmul.u32 %v1102, 58254
        %v1108 = vshll.u32 %v1105, 16
        %v1109 = vshrl.u32 %v1105, 16
        %v1110 = vshll.u32 %v1106, 16
        %v1111 = vshrl.u32 %v1106, 16
        %vm1112 = vc.u32 %v1104, %v1108
        %v1113 = vsel %vm1112, 1, 0
        %v1114 = vadd.s32 %v1104, %v1108
        %v1115 = vadd.s32 %v1107, %v1113
        %vm1116 = vc.u32 %v1114, %v1110
        %v1117 = vsel %vm1116, 1, 0
        %v1118 = vadd.s32 %v1114, %v1110
        %v1119 = vadd.s32 %v1115, %v1117
        %v1120 = vadd.s32 %v1119, %v1109
        %v1121 = vadd.s32 %v1120, %v1111
        %v1122 = vshrl.u32 %v1121, 4
        %v1123 = vmul.u32 %v1122, 18
        %v1124 = vsub.s32 %v1100, %v1123
        %v1125 = vsub.s32 0, %v1124
        %v1126 = vsel %vm1098, %v1125, %v1124
        %vm1127 = vcmp.ne.s32.totalorder %v633, 0
        %vm1128 = vcmp.ne.s32.totalorder %v662, 0
        %vm1129 = vcmp.ne.s32.totalorder %v691, 0
        %vm1130 = vcmp.ne.s32.totalorder %v720, 0
        %vm1131 = vcmp.ne.s32.totalorder %v749, 0
        %vm1132 = vcmp.ne.s32.totalorder %v778, 0
        %vm1133 = vcmp.ne.s32.totalorder %v807, 0
        %vm1134 = vcmp.ne.s32.totalorder %v836, 0
        %vm1135 = vcmp.ne.s32.totalorder %v865, 0
        %vm1136 = vcmp.ne.s32.totalorder %v894, 0
        %vm1137 = vcmp.ne.s32.totalorder %v923, 0
        %vm1138 = vcmp.ne.s32.totalorder %v952, 0
        %vm1139 = vcmp.ne.s32.totalorder %v981, 0
        %vm1140 = vcmp.ne.s32.totalorder %v1010, 0
        %vm1141 = vcmp.ne.s32.totalorder %v1039, 0
        %vm1142 = vcmp.ne.s32.totalorder %v1068, 0
        %vm1143 = vcmp.ne.s32.totalorder %v1097, 0
        %vm1144 = vcmp.ne.s32.totalorder %v1126, 0
        %vm1145 = vcmp.lt.s32.totalorder %v633, 0
        %vm1146 = vcmp.lt.s32.totalorder %v662, 0
        %vm1147 = vcmp.lt.s32.totalorder %v691, 0
        %vm1148 = vcmp.lt.s32.totalorder %v720, 0
        %vm1149 = vcmp.lt.s32.totalorder %v749, 0
        %vm1150 = vcmp.lt.s32.totalorder %v778, 0
        %vm1151 = vcmp.lt.s32.totalorder %v807, 0
        %vm1152 = vcmp.lt.s32.totalorder %v836, 0
        %vm1153 = vcmp.lt.s32.totalorder %v865, 0
        %vm1154 = vcmp.lt.s32.totalorder %v894, 0
        %vm1155 = vcmp.lt.s32.totalorder %v923, 0
        %vm1156 = vcmp.lt.s32.totalorder %v952, 0
        %vm1157 = vcmp.lt.s32.totalorder %v981, 0
        %vm1158 = vcmp.lt.s32.totalorder %v1010, 0
        %vm1159 = vcmp.lt.s32.totalorder %v1039, 0
        %vm1160 = vcmp.lt.s32.totalorder %v1068, 0
        %vm1161 = vcmp.lt.s32.totalorder %v1097, 0
        %vm1162 = vcmp.lt.s32.totalorder %v1126, 0
        %vm1163 = vmand %vm1145, %vm1127
        %vm1164 = vmand %vm1146, %vm1128
        %vm1165 = vmand %vm1147, %vm1129
        %vm1166 = vmand %vm1148, %vm1130
        %vm1167 = vmand %vm1149, %vm1131
        %vm1168 = vmand %vm1150, %vm1132
        %vm1169 = vmand %vm1151, %vm1133
        %vm1170 = vmand %vm1152, %vm1134
        %vm1171 = vmand %vm1153, %vm1135
        %vm1172 = vmand %vm1154, %vm1136
        %vm1173 = vmand %vm1155, %vm1137
        %vm1174 = vmand %vm1156, %vm1138
        %vm1175 = vmand %vm1157, %vm1139
        %vm1176 = vmand %vm1158, %vm1140
        %vm1177 = vmand %vm1159, %vm1141
        %vm1178 = vmand %vm1160, %vm1142
        %vm1179 = vmand %vm1161, %vm1143
        %vm1180 = vmand %vm1162, %vm1144
        %v1181 = vadd.s32 %v633, 18
        %v1182 = vadd.s32 %v662, 18
        %v1183 = vadd.s32 %v691, 18
        %v1184 = vadd.s32 %v720, 18
        %v1185 = vadd.s32 %v749, 18
        %v1186 = vadd.s32 %v778, 18
        %v1187 = vadd.s32 %v807, 18
        %v1188 = vadd.s32 %v836, 18
        %v1189 = vadd.s32 %v865, 18
        %v1190 = vadd.s32 %v894, 18
        %v1191 = vadd.s32 %v923, 18
        %v1192 = vadd.s32 %v952, 18
        %v1193 = vadd.s32 %v981, 18
        %v1194 = vadd.s32 %v1010, 18
        %v1195 = vadd.s32 %v1039, 18
        %v1196 = vadd.s32 %v1068, 18
        %v1197 = vadd.s32 %v1097, 18
        %v1198 = vadd.s32 %v1126, 18
        %v1199 = vsel %vm1163, %v1181, %v633
        %v1200 = vsel %vm1164, %v1182, %v662
        %v1201 = vsel %vm1165, %v1183, %v691
        %v1202 = vsel %vm1166, %v1184, %v720
        %v1203 = vsel %vm1167, %v1185, %v749
        %v1204 = vsel %vm1168, %v1186, %v778
        %v1205 = vsel %vm1169, %v1187, %v807
        %v1206 = vsel %vm1170, %v1188, %v836
        %v1207 = vsel %vm1171, %v1189, %v865
        %v1208 = vsel %vm1172, %v1190, %v894
        %v1209 = vsel %vm1173, %v1191, %v923
        %v1210 = vsel %vm1174, %v1192, %v952
        %v1211 = vsel %vm1175, %v1193, %v981
        %v1212 = vsel %vm1176, %v1194, %v1010
        %v1213 = vsel %vm1177, %v1195, %v1039
        %v1214 = vsel %vm1178, %v1196, %v1068
        %v1215 = vsel %vm1179, %v1197, %v1097
        %v1216 = vsel %vm1180, %v1198, %v1126
        %vm1217 = vcmp.lt.s32.totalorder %v1199, 16
        %vm1218 = vcmp.lt.s32.totalorder %v1200, 16
        %vm1219 = vcmp.lt.s32.totalorder %v1201, 16
        %vm1220 = vcmp.lt.s32.totalorder %v1202, 16
        %vm1221 = vcmp.lt.s32.totalorder %v1203, 16
        %vm1222 = vcmp.lt.s32.totalorder %v1204, 16
        %vm1223 = vcmp.lt.s32.totalorder %v1205, 16
        %vm1224 = vcmp.lt.s32.totalorder %v1206, 16
        %vm1225 = vcmp.lt.s32.totalorder %v1207, 16
        %vm1226 = vcmp.lt.s32.totalorder %v1208, 16
        %vm1227 = vcmp.lt.s32.totalorder %v1209, 16
        %vm1228 = vcmp.lt.s32.totalorder %v1210, 16
        %vm1229 = vcmp.lt.s32.totalorder %v1211, 16
        %vm1230 = vcmp.lt.s32.totalorder %v1212, 16
        %vm1231 = vcmp.lt.s32.totalorder %v1213, 16
        %vm1232 = vcmp.lt.s32.totalorder %v1214, 16
        %vm1233 = vcmp.lt.s32.totalorder %v1215, 16
        %vm1234 = vcmp.lt.s32.totalorder %v1216, 16
        %v1235 = vld [vmem:[#allocation2] sm:$0xf]
        %v1236 = vld [vmem:[#allocation2 + $0x4] sm:$0xf]
        %v1237 = vld [vmem:[#allocation2 + $0x8] sm:$0xf]
        %v1238 = vld [vmem:[#allocation2 + $0xc] sm:$0xf]
        %v1239 = vld [vmem:[#allocation2 + $0x10] sm:$0xf]
        %v1240 = vld [vmem:[#allocation2 + $0x14] sm:$0xf]
        %v1241 = vld [vmem:[#allocation2 + $0x18] sm:$0xf]
        %v1242 = vld [vmem:[#allocation2 + $0x1c] sm:$0xf]
        %v1243 = vld [vmem:[#allocation2 + $0x20] sm:$0xf]
        %v1244 = vld [vmem:[#allocation2 + $0x24] sm:$0xf]
        %v1245 = vld [vmem:[#allocation2 + $0x28] sm:$0xf]
        %v1246 = vld [vmem:[#allocation2 + $0x2c] sm:$0xf]
        %v1247 = vld [vmem:[#allocation2 + $0x30] sm:$0xf]
        %v1248 = vld [vmem:[#allocation2 + $0x34] sm:$0xf]
        %v1249 = vld [vmem:[#allocation2 + $0x38] sm:$0xf]
        %v1250 = vld [vmem:[#allocation2 + $0x3c] sm:$0xf]
        %v1251 = vld [vmem:[#allocation2 + $0x40] sm:$0xf]
        %v1252 = vld [vmem:[#allocation2 + $0x44] sm:$0x7]
        %v1253 = vld [vmem:[#allocation6] sm:$0xf]
        %v1254 = vld [vmem:[#allocation6 + $0x4] sm:$0xf]
        %v1255 = vld [vmem:[#allocation6 + $0x8] sm:$0xf]
        %v1256 = vld [vmem:[#allocation6 + $0xc] sm:$0xf]
        %v1257 = vld [vmem:[#allocation6 + $0x10] sm:$0xf]
        %v1258 = vld [vmem:[#allocation6 + $0x14] sm:$0xf]
        %v1259 = vld [vmem:[#allocation6 + $0x18] sm:$0xf]
        %v1260 = vld [vmem:[#allocation6 + $0x1c] sm:$0xf]
        %v1261 = vld [vmem:[#allocation6 + $0x20] sm:$0xf]
        %v1262 = vld [vmem:[#allocation6 + $0x24] sm:$0xf]
        %v1263 = vld [vmem:[#allocation6 + $0x28] sm:$0xf]
        %v1264 = vld [vmem:[#allocation6 + $0x2c] sm:$0xf]
        %v1265 = vld [vmem:[#allocation6 + $0x30] sm:$0xf]
        %v1266 = vld [vmem:[#allocation6 + $0x34] sm:$0xf]
        %v1267 = vld [vmem:[#allocation6 + $0x38] sm:$0xf]
        %v1268 = vld [vmem:[#allocation6 + $0x3c] sm:$0xf]
        %v1269 = vld [vmem:[#allocation2 + $0x44] sm:$0xf]
        %s1270 = scalar_lea.vmem [#allocation6], 64
        %v1271 = vld [vmem:[%s1270] sm:$0xf]
        %v1272 = vld [vmem:[%s1270 + $0x4] sm:$0xf]
        %v1273 = vld [vmem:[%s1270 + $0x8] sm:$0xf]
        %v1274 = vld [vmem:[%s1270 + $0xc] sm:$0xf]
        %v1275 = vld [vmem:[%s1270 + $0x10] sm:$0xf]
        %v1276 = vld [vmem:[%s1270 + $0x14] sm:$0xf]
        %v1277 = vld [vmem:[%s1270 + $0x18] sm:$0xf]
        %v1278 = vld [vmem:[%s1270 + $0x1c] sm:$0xf]
        %v1279 = vld [vmem:[%s1270 + $0x20] sm:$0xf]
        %v1280 = vld [vmem:[%s1270 + $0x24] sm:$0xf]
        %v1281 = vld [vmem:[%s1270 + $0x28] sm:$0xf]
        %v1282 = vld [vmem:[%s1270 + $0x2c] sm:$0xf]
        %v1283 = vld [vmem:[%s1270 + $0x30] sm:$0xf]
        %v1284 = vld [vmem:[%s1270 + $0x34] sm:$0xf]
        %v1285 = vld [vmem:[%s1270 + $0x38] sm:$0xf]
        %v1286 = vld [vmem:[%s1270 + $0x3c] sm:$0xf]
        %v1305 = vunpack.c.l.b16 %v1235
        %v1306 = vunpack.c.l.b16 %v1236
        %v1307 = vunpack.c.l.b16 %v1237
        %v1308 = vunpack.c.l.b16 %v1238
        %v1309 = vunpack.c.l.b16 %v1239
        %v1310 = vunpack.c.l.b16 %v1240
        %v1311 = vunpack.c.l.b16 %v1241
        %v1312 = vunpack.c.l.b16 %v1242
        %v1313 = vunpack.c.l.b16 %v1243
        %v1314 = vunpack.c.l.b16 %v1244
        %v1315 = vunpack.c.l.b16 %v1245
        %v1316 = vunpack.c.l.b16 %v1246
        %v1317 = vunpack.c.l.b16 %v1247
        %v1318 = vunpack.c.l.b16 %v1248
        %v1319 = vunpack.c.l.b16 %v1249
        %v1320 = vunpack.c.l.b16 %v1250
        %v1321 = vunpack.c.l.b16 %v1251
        %v1322 = vunpack.c.l.b16 %v1269
        %v1323 = vpack.c.b16 %v1306, %v1305
        %v1324 = vpack.c.b16 %v1308, %v1307
        %v1325 = vpack.c.b16 %v1310, %v1309
        %v1326 = vpack.c.b16 %v1312, %v1311
        %v1327 = vpack.c.b16 %v1314, %v1313
        %v1328 = vpack.c.b16 %v1316, %v1315
        %v1329 = vpack.c.b16 %v1318, %v1317
        %v1330 = vpack.c.b16 %v1320, %v1319
        %v1331 = vpack.c.b16 %v1322, %v1321
        %vm1332 = vsmask.f32 7424
        %v1334 = vshrl.u32 %v1323, 16
        %v1336 = vshll.u32 %v1323, 16
        %v1338 = vrot.slane %v1336, 1
        %v1339 = vor.u32 %v1334, %v1338
        %v1341 = vshll.u32 %v1324, 16
        %v1343 = vrot.slane %v1341, 1
        %v1344 = vsel %vm1332, %v1339, %v1343
        %v1345 = vshrl.u32 %v1324, 16
        %v1347 = vor.u32 %v1345, %v1343
        %v1349 = vshll.u32 %v1325, 16
        %v1351 = vrot.slane %v1349, 1
        %v1352 = vsel %vm1332, %v1347, %v1351
        %v1353 = vshrl.u32 %v1325, 16
        %v1355 = vor.u32 %v1353, %v1351
        %v1357 = vshll.u32 %v1326, 16
        %v1359 = vrot.slane %v1357, 1
        %v1360 = vsel %vm1332, %v1355, %v1359
        %v1361 = vshrl.u32 %v1326, 16
        %v1363 = vor.u32 %v1361, %v1359
        %v1365 = vshll.u32 %v1327, 16
        %v1367 = vrot.slane %v1365, 1
        %v1368 = vsel %vm1332, %v1363, %v1367
        %v1369 = vshrl.u32 %v1327, 16
        %v1371 = vor.u32 %v1369, %v1367
        %v1373 = vshll.u32 %v1328, 16
        %v1375 = vrot.slane %v1373, 1
        %v1376 = vsel %vm1332, %v1371, %v1375
        %v1377 = vshrl.u32 %v1328, 16
        %v1379 = vor.u32 %v1377, %v1375
        %v1381 = vshll.u32 %v1329, 16
        %v1383 = vrot.slane %v1381, 1
        %v1384 = vsel %vm1332, %v1379, %v1383
        %v1385 = vshrl.u32 %v1329, 16
        %v1387 = vor.u32 %v1385, %v1383
        %v1389 = vshll.u32 %v1330, 16
        %v1391 = vrot.slane %v1389, 1
        %v1392 = vsel %vm1332, %v1387, %v1391
        %v1393 = vshrl.u32 %v1330, 16
        %v1395 = vor.u32 %v1393, %v1391
        %v1397 = vshll.u32 %v1331, 16
        %v1399 = vrot.slane %v1397, 1
        %v1400 = vsel %vm1332, %v1395, %v1399
        %v1401 = vshrl.u32 %v1331, 16
        %v1403 = vor.u32 %v1401, %v1399
        %v1429 = vunpack.c.l.b16 %v1271
        %v1430 = vunpack.c.l.b16 %v1272
        %v1431 = vunpack.c.l.b16 %v1273
        %v1432 = vunpack.c.l.b16 %v1274
        %v1433 = vunpack.c.l.b16 %v1275
        %v1434 = vunpack.c.l.b16 %v1276
        %v1435 = vunpack.c.l.b16 %v1277
        %v1436 = vunpack.c.l.b16 %v1278
        %v1437 = vunpack.c.l.b16 %v1279
        %v1438 = vunpack.c.l.b16 %v1280
        %v1439 = vunpack.c.l.b16 %v1281
        %v1440 = vunpack.c.l.b16 %v1282
        %v1441 = vunpack.c.l.b16 %v1283
        %v1442 = vunpack.c.l.b16 %v1284
        %v1443 = vunpack.c.l.b16 %v1285
        %v1444 = vunpack.c.l.b16 %v1286
        %v1445 = vpack.c.b16 %v1430, %v1429
        %v1446 = vpack.c.b16 %v1432, %v1431
        %v1447 = vpack.c.b16 %v1434, %v1433
        %v1448 = vpack.c.b16 %v1436, %v1435
        %v1449 = vpack.c.b16 %v1438, %v1437
        %v1450 = vpack.c.b16 %v1440, %v1439
        %v1451 = vpack.c.b16 %v1442, %v1441
        %v1452 = vpack.c.b16 %v1444, %v1443
        %1461 = vmatpush.bf16.msra.mxu0 %v1452
        %1462 = vmatpush.bf16.msra.mxu0 %v1451
        %1463 = vmatpush.bf16.msra.mxu0 %v1450
        %1464 = vmatpush.bf16.msra.mxu0 %v1449
        %1465 = vmatpush.bf16.msra.mxu0 %v1448
        %1466 = vmatpush.bf16.msra.mxu0 %v1447
        %1467 = vmatpush.bf16.msra.mxu0 %v1446
        %1468 = vmatpush.bf16.msra.mxu0 %v1445
        %1469 = vmatmul.bf16.gmra.mxu0 %v1344
        %v1470 = vpop.f32.mrf.mxu0
        %v1471 = vadd.f32 0.0, %v1470
        %v1472 = vpop.f32.mrf.mxu0
        %v1473 = vadd.f32 0.0, %v1472
        %1474 = vmatmul.bf16.gmra.mxu0 %v1352
        %v1475 = vpop.f32.mrf.mxu0
        %v1476 = vadd.f32 0.0, %v1475
        %v1477 = vpop.f32.mrf.mxu0
        %v1478 = vadd.f32 0.0, %v1477
        %1479 = vmatmul.bf16.gmra.mxu0 %v1360
        %v1480 = vpop.f32.mrf.mxu0
        %v1481 = vadd.f32 0.0, %v1480
        %v1482 = vpop.f32.mrf.mxu0
        %v1483 = vadd.f32 0.0, %v1482
        %1484 = vmatmul.bf16.gmra.mxu0 %v1368
        %v1485 = vpop.f32.mrf.mxu0
        %v1486 = vadd.f32 0.0, %v1485
        %v1487 = vpop.f32.mrf.mxu0
        %v1488 = vadd.f32 0.0, %v1487
        %1489 = vmatmul.bf16.gmra.mxu0 %v1376
        %v1490 = vpop.f32.mrf.mxu0
        %v1491 = vadd.f32 0.0, %v1490
        %v1492 = vpop.f32.mrf.mxu0
        %v1493 = vadd.f32 0.0, %v1492
        %1494 = vmatmul.bf16.gmra.mxu0 %v1384
        %v1495 = vpop.f32.mrf.mxu0
        %v1496 = vadd.f32 0.0, %v1495
        %v1497 = vpop.f32.mrf.mxu0
        %v1498 = vadd.f32 0.0, %v1497
        %1499 = vmatmul.bf16.gmra.mxu0 %v1392
        %v1500 = vpop.f32.mrf.mxu0
        %v1501 = vadd.f32 0.0, %v1500
        %v1502 = vpop.f32.mrf.mxu0
        %v1503 = vadd.f32 0.0, %v1502
        %1504 = vmatmul.bf16.gmra.mxu0 %v1400
        %v1505 = vpop.f32.mrf.mxu0
        %v1506 = vadd.f32 0.0, %v1505
        %v1507 = vpop.f32.mrf.mxu0
        %v1508 = vadd.f32 0.0, %v1507
        %1509 = vmatmul.bf16.gmra.mxu0 %v1403
        %v1510 = vpop.f32.mrf.mxu0
        %v1511 = vadd.f32 0.0, %v1510
        %v1512 = vpop.f32.mrf.mxu0
        %v1513 = vadd.f32 0.0, %v1512
        %1514 = vdwg.mxu0
        %v1516 = vunpack.c.l.b16 %v1252
        %v1517 = vpack.c.b16 %v1516, %v1321
        %v1543 = vunpack.c.l.b16 %v1253
        %v1544 = vunpack.c.l.b16 %v1254
        %v1545 = vunpack.c.l.b16 %v1255
        %v1546 = vunpack.c.l.b16 %v1256
        %v1547 = vunpack.c.l.b16 %v1257
        %v1548 = vunpack.c.l.b16 %v1258
        %v1549 = vunpack.c.l.b16 %v1259
        %v1550 = vunpack.c.l.b16 %v1260
        %v1551 = vunpack.c.l.b16 %v1261
        %v1552 = vunpack.c.l.b16 %v1262
        %v1553 = vunpack.c.l.b16 %v1263
        %v1554 = vunpack.c.l.b16 %v1264
        %v1555 = vunpack.c.l.b16 %v1265
        %v1556 = vunpack.c.l.b16 %v1266
        %v1557 = vunpack.c.l.b16 %v1267
        %v1558 = vunpack.c.l.b16 %v1268
        %v1559 = vpack.c.b16 %v1544, %v1543
        %v1560 = vpack.c.b16 %v1546, %v1545
        %v1561 = vpack.c.b16 %v1548, %v1547
        %v1562 = vpack.c.b16 %v1550, %v1549
        %v1563 = vpack.c.b16 %v1552, %v1551
        %v1564 = vpack.c.b16 %v1554, %v1553
        %v1565 = vpack.c.b16 %v1556, %v1555
        %v1566 = vpack.c.b16 %v1558, %v1557
        %1575 = vmatpush.bf16.msra.mxu0 %v1566
        %1576 = vmatpush.bf16.msra.mxu0 %v1565
        %1577 = vmatpush.bf16.msra.mxu0 %v1564
        %1578 = vmatpush.bf16.msra.mxu0 %v1563
        %1579 = vmatpush.bf16.msra.mxu0 %v1562
        %1580 = vmatpush.bf16.msra.mxu0 %v1561
        %1581 = vmatpush.bf16.msra.mxu0 %v1560
        %1582 = vmatpush.bf16.msra.mxu0 %v1559
        %1583 = vmatmul.bf16.gmra.mxu0 %v1323
        %v1584 = vpop.f32.mrf.mxu0
        %v1585 = vadd.f32 %v1471, %v1584
        %v1586 = vpop.f32.mrf.mxu0
        %v1587 = vadd.f32 %v1473, %v1586
        %1588 = vmatmul.bf16.gmra.mxu0 %v1324
        %v1589 = vpop.f32.mrf.mxu0
        %v1590 = vadd.f32 %v1476, %v1589
        %v1591 = vpop.f32.mrf.mxu0
        %v1592 = vadd.f32 %v1478, %v1591
        %1593 = vmatmul.bf16.gmra.mxu0 %v1325
        %v1594 = vpop.f32.mrf.mxu0
        %v1595 = vadd.f32 %v1481, %v1594
        %v1596 = vpop.f32.mrf.mxu0
        %v1597 = vadd.f32 %v1483, %v1596
        %1598 = vmatmul.bf16.gmra.mxu0 %v1326
        %v1599 = vpop.f32.mrf.mxu0
        %v1600 = vadd.f32 %v1486, %v1599
        %v1601 = vpop.f32.mrf.mxu0
        %v1602 = vadd.f32 %v1488, %v1601
        %1603 = vmatmul.bf16.gmra.mxu0 %v1327
        %v1604 = vpop.f32.mrf.mxu0
        %v1605 = vadd.f32 %v1491, %v1604
        %v1606 = vpop.f32.mrf.mxu0
        %v1607 = vadd.f32 %v1493, %v1606
        %1608 = vmatmul.bf16.gmra.mxu0 %v1328
        %v1609 = vpop.f32.mrf.mxu0
        %v1610 = vadd.f32 %v1496, %v1609
        %v1611 = vpop.f32.mrf.mxu0
        %v1612 = vadd.f32 %v1498, %v1611
        %1613 = vmatmul.bf16.gmra.mxu0 %v1329
        %v1614 = vpop.f32.mrf.mxu0
        %v1615 = vadd.f32 %v1501, %v1614
        %v1616 = vpop.f32.mrf.mxu0
        %v1617 = vadd.f32 %v1503, %v1616
        %1618 = vmatmul.bf16.gmra.mxu0 %v1330
        %v1619 = vpop.f32.mrf.mxu0
        %v1620 = vadd.f32 %v1506, %v1619
        %v1621 = vpop.f32.mrf.mxu0
        %v1622 = vadd.f32 %v1508, %v1621
        %1623 = vmatmul.bf16.gmra.mxu0 %v1517
        %v1624 = vpop.f32.mrf.mxu0
        %v1625 = vadd.f32 %v1511, %v1624
        %v1626 = vpop.f32.mrf.mxu0
        %v1627 = vadd.f32 %v1513, %v1626
        %1628 = vdwg.mxu0
        %v1629 = vld [vmem:[#allocation2] sm:$0xe]
        %s1630 = scalar_lea.vmem [#allocation6], 128
        %v1631 = vld [vmem:[%s1630] sm:$0xf]
        %v1632 = vld [vmem:[%s1630 + $0x4] sm:$0xf]
        %v1633 = vld [vmem:[%s1630 + $0x8] sm:$0xf]
        %v1634 = vld [vmem:[%s1630 + $0xc] sm:$0xf]
        %v1635 = vld [vmem:[%s1630 + $0x10] sm:$0xf]
        %v1636 = vld [vmem:[%s1630 + $0x14] sm:$0xf]
        %v1637 = vld [vmem:[%s1630 + $0x18] sm:$0xf]
        %v1638 = vld [vmem:[%s1630 + $0x1c] sm:$0xf]
        %v1639 = vld [vmem:[%s1630 + $0x20] sm:$0xf]
        %v1640 = vld [vmem:[%s1630 + $0x24] sm:$0xf]
        %v1641 = vld [vmem:[%s1630 + $0x28] sm:$0xf]
        %v1642 = vld [vmem:[%s1630 + $0x2c] sm:$0xf]
        %v1643 = vld [vmem:[%s1630 + $0x30] sm:$0xf]
        %v1644 = vld [vmem:[%s1630 + $0x34] sm:$0xf]
        %v1645 = vld [vmem:[%s1630 + $0x38] sm:$0xf]
        %v1646 = vld [vmem:[%s1630 + $0x3c] sm:$0xf]
        %v1648 = vunpack.c.l.b16 %v1629
        %v1649 = vpack.c.b16 %v1306, %v1648
        %vm1650 = vcmask 1046528
        %v1651 = vrot.slane %v1649, 1
        %v1652 = vrot.slane %v1324, 1
        %v1653 = vsel %vm1650, %v1651, %v1652
        %v1654 = vrot.slane %v1325, 1
        %v1655 = vsel %vm1650, %v1652, %v1654
        %v1656 = vrot.slane %v1326, 1
        %v1657 = vsel %vm1650, %v1654, %v1656
        %v1658 = vrot.slane %v1327, 1
        %v1659 = vsel %vm1650, %v1656, %v1658
        %v1660 = vrot.slane %v1328, 1
        %v1661 = vsel %vm1650, %v1658, %v1660
        %v1662 = vrot.slane %v1329, 1
        %v1663 = vsel %vm1650, %v1660, %v1662
        %v1664 = vrot.slane %v1330, 1
        %v1665 = vsel %vm1650, %v1662, %v1664
        %v1666 = vrot.slane %v1331, 1
        %v1667 = vsel %vm1650, %v1664, %v1666
        %v1693 = vunpack.c.l.b16 %v1631
        %v1694 = vunpack.c.l.b16 %v1632
        %v1695 = vunpack.c.l.b16 %v1633
        %v1696 = vunpack.c.l.b16 %v1634
        %v1697 = vunpack.c.l.b16 %v1635
        %v1698 = vunpack.c.l.b16 %v1636
        %v1699 = vunpack.c.l.b16 %v1637
        %v1700 = vunpack.c.l.b16 %v1638
        %v1701 = vunpack.c.l.b16 %v1639
        %v1702 = vunpack.c.l.b16 %v1640
        %v1703 = vunpack.c.l.b16 %v1641
        %v1704 = vunpack.c.l.b16 %v1642
        %v1705 = vunpack.c.l.b16 %v1643
        %v1706 = vunpack.c.l.b16 %v1644
        %v1707 = vunpack.c.l.b16 %v1645
        %v1708 = vunpack.c.l.b16 %v1646
        %v1709 = vpack.c.b16 %v1694, %v1693
        %v1710 = vpack.c.b16 %v1696, %v1695
        %v1711 = vpack.c.b16 %v1698, %v1697
        %v1712 = vpack.c.b16 %v1700, %v1699
        %v1713 = vpack.c.b16 %v1702, %v1701
        %v1714 = vpack.c.b16 %v1704, %v1703
        %v1715 = vpack.c.b16 %v1706, %v1705
        %v1716 = vpack.c.b16 %v1708, %v1707
        %1725 = vmatpush.bf16.msra.mxu0 %v1716
        %1726 = vmatpush.bf16.msra.mxu0 %v1715
        %1727 = vmatpush.bf16.msra.mxu0 %v1714
        %1728 = vmatpush.bf16.msra.mxu0 %v1713
        %1729 = vmatpush.bf16.msra.mxu0 %v1712
        %1730 = vmatpush.bf16.msra.mxu0 %v1711
        %1731 = vmatpush.bf16.msra.mxu0 %v1710
        %1732 = vmatpush.bf16.msra.mxu0 %v1709
        %1733 = vmatmul.bf16.gmra.mxu0 %v1653
        %v1734 = vpop.f32.mrf.mxu0
        %v1735 = vadd.f32 0.0, %v1734
        %v1736 = vpop.f32.mrf.mxu0
        %v1737 = vadd.f32 0.0, %v1736
        %1738 = vmatmul.bf16.gmra.mxu0 %v1655
        %v1739 = vpop.f32.mrf.mxu0
        %v1740 = vadd.f32 0.0, %v1739
        %v1741 = vpop.f32.mrf.mxu0
        %v1742 = vadd.f32 0.0, %v1741
        %1743 = vmatmul.bf16.gmra.mxu0 %v1657
        %v1744 = vpop.f32.mrf.mxu0
        %v1745 = vadd.f32 0.0, %v1744
        %v1746 = vpop.f32.mrf.mxu0
        %v1747 = vadd.f32 0.0, %v1746
        %1748 = vmatmul.bf16.gmra.mxu0 %v1659
        %v1749 = vpop.f32.mrf.mxu0
        %v1750 = vadd.f32 0.0, %v1749
        %v1751 = vpop.f32.mrf.mxu0
        %v1752 = vadd.f32 0.0, %v1751
        %1753 = vmatmul.bf16.gmra.mxu0 %v1661
        %v1754 = vpop.f32.mrf.mxu0
        %v1755 = vadd.f32 0.0, %v1754
        %v1756 = vpop.f32.mrf.mxu0
        %v1757 = vadd.f32 0.0, %v1756
        %1758 = vmatmul.bf16.gmra.mxu0 %v1663
        %v1759 = vpop.f32.mrf.mxu0
        %v1760 = vadd.f32 0.0, %v1759
        %v1761 = vpop.f32.mrf.mxu0
        %v1762 = vadd.f32 0.0, %v1761
        %1763 = vmatmul.bf16.gmra.mxu0 %v1665
        %v1764 = vpop.f32.mrf.mxu0
        %v1765 = vadd.f32 0.0, %v1764
        %v1766 = vpop.f32.mrf.mxu0
        %v1767 = vadd.f32 0.0, %v1766
        %1768 = vmatmul.bf16.gmra.mxu0 %v1667
        %v1769 = vpop.f32.mrf.mxu0
        %v1770 = vadd.f32 0.0, %v1769
        %v1771 = vpop.f32.mrf.mxu0
        %v1772 = vadd.f32 0.0, %v1771
        %1773 = vmatmul.bf16.gmra.mxu0 %v1666
        %v1774 = vpop.f32.mrf.mxu0
        %v1775 = vadd.f32 0.0, %v1774
        %v1776 = vpop.f32.mrf.mxu0
        %v1777 = vadd.f32 0.0, %v1776
        %1778 = vdwg.mxu0
        %v1779 = vadd.f32 %v1585, %v1735
        %v1780 = vadd.f32 %v1587, %v1737
        %v1781 = vadd.f32 %v1590, %v1740
        %v1782 = vadd.f32 %v1592, %v1742
        %v1783 = vadd.f32 %v1595, %v1745
        %v1784 = vadd.f32 %v1597, %v1747
        %v1785 = vadd.f32 %v1600, %v1750
        %v1786 = vadd.f32 %v1602, %v1752
        %v1787 = vadd.f32 %v1605, %v1755
        %v1788 = vadd.f32 %v1607, %v1757
        %v1789 = vadd.f32 %v1610, %v1760
        %v1790 = vadd.f32 %v1612, %v1762
        %v1791 = vadd.f32 %v1615, %v1765
        %v1792 = vadd.f32 %v1617, %v1767
        %v1793 = vadd.f32 %v1620, %v1770
        %v1794 = vadd.f32 %v1622, %v1772
        %v1795 = vadd.f32 %v1625, %v1775
        %v1796 = vadd.f32 %v1627, %v1777
        %v1797 = vld [vmem:[#allocation9] sm:$0x1]
        %v1798 = vperm.slane %v1797, 0
        %v1799 = vmul.f32 %v1779, %v1798
        %v1800 = vmul.f32 %v1780, %v1798
        %v1801 = vmul.f32 %v1781, %v1798
        %v1802 = vmul.f32 %v1782, %v1798
        %v1803 = vmul.f32 %v1783, %v1798
        %v1804 = vmul.f32 %v1784, %v1798
        %v1805 = vmul.f32 %v1785, %v1798
        %v1806 = vmul.f32 %v1786, %v1798
        %v1807 = vmul.f32 %v1787, %v1798
        %v1808 = vmul.f32 %v1788, %v1798
        %v1809 = vmul.f32 %v1789, %v1798
        %v1810 = vmul.f32 %v1790, %v1798
        %v1811 = vmul.f32 %v1791, %v1798
        %v1812 = vmul.f32 %v1792, %v1798
        %v1813 = vmul.f32 %v1793, %v1798
        %v1814 = vmul.f32 %v1794, %v1798
        %v1815 = vmul.f32 %v1795, %v1798
        %v1816 = vmul.f32 %v1796, %v1798
        %v1817 = vld [vmem:[#allocation9 + $0x1] sm:$0x1]
        %v1818 = vperm.slane %v1817, 0
        %v1819 = vadd.f32 %v1799, %v1818
        %v1820 = vadd.f32 %v1800, %v1818
        %v1821 = vadd.f32 %v1801, %v1818
        %v1822 = vadd.f32 %v1802, %v1818
        %v1823 = vadd.f32 %v1803, %v1818
        %v1824 = vadd.f32 %v1804, %v1818
        %v1825 = vadd.f32 %v1805, %v1818
        %v1826 = vadd.f32 %v1806, %v1818
        %v1827 = vadd.f32 %v1807, %v1818
        %v1828 = vadd.f32 %v1808, %v1818
        %v1829 = vadd.f32 %v1809, %v1818
        %v1830 = vadd.f32 %v1810, %v1818
        %v1831 = vadd.f32 %v1811, %v1818
        %v1832 = vadd.f32 %v1812, %v1818
        %v1833 = vadd.f32 %v1813, %v1818
        %v1834 = vadd.f32 %v1814, %v1818
        %v1835 = vadd.f32 %v1815, %v1818
        %v1836 = vadd.f32 %v1816, %v1818
        %v1837 = vmax.f32 %v1819, 0.0
        %v1838 = vmax.f32 %v1820, 0.0
        %v1839 = vmax.f32 %v1821, 0.0
        %v1840 = vmax.f32 %v1822, 0.0
        %v1841 = vmax.f32 %v1823, 0.0
        %v1842 = vmax.f32 %v1824, 0.0
        %v1843 = vmax.f32 %v1825, 0.0
        %v1844 = vmax.f32 %v1826, 0.0
        %v1845 = vmax.f32 %v1827, 0.0
        %v1846 = vmax.f32 %v1828, 0.0
        %v1847 = vmax.f32 %v1829, 0.0
        %v1848 = vmax.f32 %v1830, 0.0
        %v1849 = vmax.f32 %v1831, 0.0
        %v1850 = vmax.f32 %v1832, 0.0
        %v1851 = vmax.f32 %v1833, 0.0
        %v1852 = vmax.f32 %v1834, 0.0
        %v1853 = vmax.f32 %v1835, 0.0
        %v1854 = vmax.f32 %v1836, 0.0
        %v1855 = vsel %vm1217, 1, 0
        %v1856 = vsel %vm1218, 1, 0
        %v1857 = vsel %vm1219, 1, 0
        %v1858 = vsel %vm1220, 1, 0
        %v1859 = vsel %vm1221, 1, 0
        %v1860 = vsel %vm1222, 1, 0
        %v1861 = vsel %vm1223, 1, 0
        %v1862 = vsel %vm1224, 1, 0
        %v1863 = vsel %vm1225, 1, 0
        %v1864 = vsel %vm1226, 1, 0
        %v1865 = vsel %vm1227, 1, 0
        %v1866 = vsel %vm1228, 1, 0
        %v1867 = vsel %vm1229, 1, 0
        %v1868 = vsel %vm1230, 1, 0
        %v1869 = vsel %vm1231, 1, 0
        %v1870 = vsel %vm1232, 1, 0
        %v1871 = vsel %vm1233, 1, 0
        %v1872 = vsel %vm1234, 1, 0
        %vm1873 = vcmp.eq.s32.totalorder %v1855, 1
        %vm1874 = vcmp.eq.s32.totalorder %v1856, 1
        %vm1875 = vcmp.eq.s32.totalorder %v1857, 1
        %vm1876 = vcmp.eq.s32.totalorder %v1858, 1
        %vm1877 = vcmp.eq.s32.totalorder %v1859, 1
        %vm1878 = vcmp.eq.s32.totalorder %v1860, 1
        %vm1879 = vcmp.eq.s32.totalorder %v1861, 1
        %vm1880 = vcmp.eq.s32.totalorder %v1862, 1
        %vm1881 = vcmp.eq.s32.totalorder %v1863, 1
        %vm1882 = vcmp.eq.s32.totalorder %v1864, 1
        %vm1883 = vcmp.eq.s32.totalorder %v1865, 1
        %vm1884 = vcmp.eq.s32.totalorder %v1866, 1
        %vm1885 = vcmp.eq.s32.totalorder %v1867, 1
        %vm1886 = vcmp.eq.s32.totalorder %v1868, 1
        %vm1887 = vcmp.eq.s32.totalorder %v1869, 1
        %vm1888 = vcmp.eq.s32.totalorder %v1870, 1
        %vm1889 = vcmp.eq.s32.totalorder %v1871, 1
        %vm1890 = vcmp.eq.s32.totalorder %v1872, 1
        %v1891 = vsel %vm1873, %v1837, 0.0
        %v1892 = vsel %vm1874, %v1838, 0.0
        %v1893 = vsel %vm1875, %v1839, 0.0
        %v1894 = vsel %vm1876, %v1840, 0.0
        %v1895 = vsel %vm1877, %v1841, 0.0
        %v1896 = vsel %vm1878, %v1842, 0.0
        %v1897 = vsel %vm1879, %v1843, 0.0
        %v1898 = vsel %vm1880, %v1844, 0.0
        %v1899 = vsel %vm1881, %v1845, 0.0
        %v1900 = vsel %vm1882, %v1846, 0.0
        %v1901 = vsel %vm1883, %v1847, 0.0
        %v1902 = vsel %vm1884, %v1848, 0.0
        %v1903 = vsel %vm1885, %v1849, 0.0
        %v1904 = vsel %vm1886, %v1850, 0.0
        %v1905 = vsel %vm1887, %v1851, 0.0
        %v1906 = vsel %vm1888, %v1852, 0.0
        %v1907 = vsel %vm1889, %v1853, 0.0
        %v1908 = vsel %vm1890, %v1854, 0.0
        %v1909 = vpack.c.bf16 %v1891, %v1891
        %v1910 = vpack.c.bf16 %v1892, %v1892
        %v1911 = vpack.c.bf16 %v1893, %v1893
        %v1912 = vpack.c.bf16 %v1894, %v1894
        %v1913 = vpack.c.bf16 %v1895, %v1895
        %v1914 = vpack.c.bf16 %v1896, %v1896
        %v1915 = vpack.c.bf16 %v1897, %v1897
        %v1916 = vpack.c.bf16 %v1898, %v1898
        %v1917 = vpack.c.bf16 %v1899, %v1899
        %v1918 = vpack.c.bf16 %v1900, %v1900
        %v1919 = vpack.c.bf16 %v1901, %v1901
        %v1920 = vpack.c.bf16 %v1902, %v1902
        %v1921 = vpack.c.bf16 %v1903, %v1903
        %v1922 = vpack.c.bf16 %v1904, %v1904
        %v1923 = vpack.c.bf16 %v1905, %v1905
        %v1924 = vpack.c.bf16 %v1906, %v1906
        %v1925 = vpack.c.bf16 %v1907, %v1907
        %v1926 = vpack.c.bf16 %v1908, %v1908
        %v1928 = vshrl.u32 %v1909, 16
        %v1930 = vrot.slane %v1928, 7
        %v1931 = vshll.u32 %v1909, 16
        %v1933 = vor.u32 %v1930, %v1931
        %v1934 = vrot.slane %v1930, 4
        %v1936 = vshrl.u32 %v1910, 16
        %v1938 = vrot.slane %v1936, 7
        %v1939 = vshll.u32 %v1910, 16
        %v1941 = vor.u32 %v1938, %v1939
        %v1942 = vsel %vm294, %v1934, %v1941
        %v1943 = vrot.slane %v1938, 4
        %v1945 = vshrl.u32 %v1911, 16
        %v1947 = vrot.slane %v1945, 7
        %v1948 = vshll.u32 %v1911, 16
        %v1950 = vor.u32 %v1947, %v1948
        %v1951 = vsel %vm294, %v1943, %v1950
        %v1952 = vrot.slane %v1947, 4
        %v1954 = vshrl.u32 %v1912, 16
        %v1956 = vrot.slane %v1954, 7
        %v1957 = vshll.u32 %v1912, 16
        %v1959 = vor.u32 %v1956, %v1957
        %v1960 = vsel %vm294, %v1952, %v1959
        %v1961 = vrot.slane %v1956, 4
        %v1963 = vshrl.u32 %v1913, 16
        %v1965 = vrot.slane %v1963, 7
        %v1966 = vshll.u32 %v1913, 16
        %v1968 = vor.u32 %v1965, %v1966
        %v1969 = vsel %vm294, %v1961, %v1968
        %v1970 = vrot.slane %v1965, 4
        %v1972 = vshrl.u32 %v1914, 16
        %v1974 = vrot.slane %v1972, 7
        %v1975 = vshll.u32 %v1914, 16
        %v1977 = vor.u32 %v1974, %v1975
        %v1978 = vsel %vm294, %v1970, %v1977
        %v1979 = vrot.slane %v1974, 4
        %v1981 = vshrl.u32 %v1915, 16
        %v1983 = vrot.slane %v1981, 7
        %v1984 = vshll.u32 %v1915, 16
        %v1986 = vor.u32 %v1983, %v1984
        %v1987 = vsel %vm294, %v1979, %v1986
        %v1988 = vrot.slane %v1983, 4
        %v1990 = vshrl.u32 %v1916, 16
        %v1992 = vrot.slane %v1990, 7
        %v1993 = vshll.u32 %v1916, 16
        %v1995 = vor.u32 %v1992, %v1993
        %v1996 = vsel %vm294, %v1988, %v1995
        %v1997 = vrot.slane %v1992, 4
        %v1999 = vshrl.u32 %v1917, 16
        %v2001 = vrot.slane %v1999, 7
        %v2002 = vshll.u32 %v1917, 16
        %v2004 = vor.u32 %v2001, %v2002
        %v2005 = vsel %vm294, %v1997, %v2004
        %v2006 = vrot.slane %v2001, 4
        %v2008 = vshrl.u32 %v1918, 16
        %v2010 = vrot.slane %v2008, 7
        %v2011 = vshll.u32 %v1918, 16
        %v2013 = vor.u32 %v2010, %v2011
        %v2014 = vsel %vm294, %v2006, %v2013
        %v2015 = vrot.slane %v2010, 4
        %v2017 = vshrl.u32 %v1919, 16
        %v2019 = vrot.slane %v2017, 7
        %v2020 = vshll.u32 %v1919, 16
        %v2022 = vor.u32 %v2019, %v2020
        %v2023 = vsel %vm294, %v2015, %v2022
        %v2024 = vrot.slane %v2019, 4
        %v2026 = vshrl.u32 %v1920, 16
        %v2028 = vrot.slane %v2026, 7
        %v2029 = vshll.u32 %v1920, 16
        %v2031 = vor.u32 %v2028, %v2029
        %v2032 = vsel %vm294, %v2024, %v2031
        %v2033 = vrot.slane %v2028, 4
        %v2035 = vshrl.u32 %v1921, 16
        %v2037 = vrot.slane %v2035, 7
        %v2038 = vshll.u32 %v1921, 16
        %v2040 = vor.u32 %v2037, %v2038
        %v2041 = vsel %vm294, %v2033, %v2040
        %v2042 = vrot.slane %v2037, 4
        %v2044 = vshrl.u32 %v1922, 16
        %v2046 = vrot.slane %v2044, 7
        %v2047 = vshll.u32 %v1922, 16
        %v2049 = vor.u32 %v2046, %v2047
        %v2050 = vsel %vm294, %v2042, %v2049
        %v2051 = vrot.slane %v2046, 4
        %v2053 = vshrl.u32 %v1923, 16
        %v2055 = vrot.slane %v2053, 7
        %v2056 = vshll.u32 %v1923, 16
        %v2058 = vor.u32 %v2055, %v2056
        %v2059 = vsel %vm294, %v2051, %v2058
        %v2060 = vrot.slane %v2055, 4
        %v2062 = vshrl.u32 %v1924, 16
        %v2064 = vrot.slane %v2062, 7
        %v2065 = vshll.u32 %v1924, 16
        %v2067 = vor.u32 %v2064, %v2065
        %v2068 = vsel %vm294, %v2060, %v2067
        %v2069 = vrot.slane %v2064, 4
        %v2071 = vshrl.u32 %v1925, 16
        %v2073 = vrot.slane %v2071, 7
        %v2074 = vshll.u32 %v1925, 16
        %v2076 = vor.u32 %v2073, %v2074
        %v2077 = vsel %vm294, %v2069, %v2076
        %v2078 = vrot.slane %v2073, 4
        %v2080 = vshrl.u32 %v1926, 16
        %v2082 = vrot.slane %v2080, 7
        %v2083 = vshll.u32 %v1926, 16
        %v2085 = vor.u32 %v2082, %v2083
        %v2086 = vsel %vm294, %v2078, %v2085
        %v2105 = vsel %vm317, %v1933, %v1235
        %2106 = vst [vmem:[#allocation2] sm:$0xf] %v2105
        %2107 = vst [vmem:[#allocation2 + $0x4] sm:$0xf] %v1942
        %2108 = vst [vmem:[#allocation2 + $0x8] sm:$0xf] %v1951
        %2109 = vst [vmem:[#allocation2 + $0xc] sm:$0xf] %v1960
        %2110 = vst [vmem:[#allocation2 + $0x10] sm:$0xf] %v1969
        %2111 = vst [vmem:[#allocation2 + $0x14] sm:$0xf] %v1978
        %2112 = vst [vmem:[#allocation2 + $0x18] sm:$0xf] %v1987
        %2113 = vst [vmem:[#allocation2 + $0x1c] sm:$0xf] %v1996
        %2114 = vst [vmem:[#allocation2 + $0x20] sm:$0xf] %v2005
        %2115 = vst [vmem:[#allocation2 + $0x24] sm:$0xf] %v2014
        %2116 = vst [vmem:[#allocation2 + $0x28] sm:$0xf] %v2023
        %2117 = vst [vmem:[#allocation2 + $0x2c] sm:$0xf] %v2032
        %2118 = vst [vmem:[#allocation2 + $0x30] sm:$0xf] %v2041
        %2119 = vst [vmem:[#allocation2 + $0x34] sm:$0xf] %v2050
        %2120 = vst [vmem:[#allocation2 + $0x38] sm:$0xf] %v2059
        %2121 = vst [vmem:[#allocation2 + $0x3c] sm:$0xf] %v2068
        %2122 = vst [vmem:[#allocation2 + $0x40] sm:$0xf] %v2077
        %v2123 = vld [vmem:[#allocation2 + $0x44] sm:$0xf]
        %v2124 = vsel %vm448, %v2086, %v2123
        %2125 = vst [vmem:[#allocation2 + $0x44] sm:$0xf] %v2124
        %v2126 = vld [vmem:[#allocation2] sm:$0xf]
        %v2127 = vld [vmem:[#allocation2 + $0x4] sm:$0xf]
        %v2128 = vld [vmem:[#allocation2 + $0x8] sm:$0xf]
        %v2129 = vld [vmem:[#allocation2 + $0xc] sm:$0xf]
        %v2130 = vld [vmem:[#allocation2 + $0x10] sm:$0xf]
        %v2131 = vld [vmem:[#allocation2 + $0x14] sm:$0xf]
        %v2132 = vld [vmem:[#allocation2 + $0x18] sm:$0xf]
        %v2133 = vld [vmem:[#allocation2 + $0x1c] sm:$0xf]
        %v2134 = vld [vmem:[#allocation2 + $0x20] sm:$0xf]
        %v2135 = vld [vmem:[#allocation2 + $0x24] sm:$0xf]
        %v2136 = vld [vmem:[#allocation2 + $0x28] sm:$0xf]
        %v2137 = vld [vmem:[#allocation2 + $0x2c] sm:$0xf]
        %v2138 = vld [vmem:[#allocation2 + $0x30] sm:$0xf]
        %v2139 = vld [vmem:[#allocation2 + $0x34] sm:$0xf]
        %v2140 = vld [vmem:[#allocation2 + $0x38] sm:$0xf]
        %v2141 = vld [vmem:[#allocation2 + $0x3c] sm:$0xf]
        %v2142 = vld [vmem:[#allocation2 + $0x40] sm:$0xf]
        %v2143 = vld [vmem:[#allocation2 + $0x44] sm:$0x7]
        %v2144 = vld [vmem:[#allocation8] sm:$0xf]
        %v2145 = vld [vmem:[#allocation8 + $0x4] sm:$0xf]
        %v2146 = vld [vmem:[#allocation8 + $0x8] sm:$0xf]
        %v2147 = vld [vmem:[#allocation8 + $0xc] sm:$0xf]
        %v2148 = vld [vmem:[#allocation8 + $0x10] sm:$0xf]
        %v2149 = vld [vmem:[#allocation8 + $0x14] sm:$0xf]
        %v2150 = vld [vmem:[#allocation8 + $0x18] sm:$0xf]
        %v2151 = vld [vmem:[#allocation8 + $0x1c] sm:$0xf]
        %v2152 = vld [vmem:[#allocation8 + $0x20] sm:$0xf]
        %v2153 = vld [vmem:[#allocation8 + $0x24] sm:$0xf]
        %v2154 = vld [vmem:[#allocation8 + $0x28] sm:$0xf]
        %v2155 = vld [vmem:[#allocation8 + $0x2c] sm:$0xf]
        %v2156 = vld [vmem:[#allocation8 + $0x30] sm:$0xf]
        %v2157 = vld [vmem:[#allocation8 + $0x34] sm:$0xf]
        %v2158 = vld [vmem:[#allocation8 + $0x38] sm:$0xf]
        %v2159 = vld [vmem:[#allocation8 + $0x3c] sm:$0xf]
        %v2160 = vld [vmem:[#allocation2 + $0x44] sm:$0xf]
        %s2161 = scalar_lea.vmem [#allocation8], 64
        %v2162 = vld [vmem:[%s2161] sm:$0xf]
        %v2163 = vld [vmem:[%s2161 + $0x4] sm:$0xf]
        %v2164 = vld [vmem:[%s2161 + $0x8] sm:$0xf]
        %v2165 = vld [vmem:[%s2161 + $0xc] sm:$0xf]
        %v2166 = vld [vmem:[%s2161 + $0x10] sm:$0xf]
        %v2167 = vld [vmem:[%s2161 + $0x14] sm:$0xf]
        %v2168 = vld [vmem:[%s2161 + $0x18] sm:$0xf]
        %v2169 = vld [vmem:[%s2161 + $0x1c] sm:$0xf]
        %v2170 = vld [vmem:[%s2161 + $0x20] sm:$0xf]
        %v2171 = vld [vmem:[%s2161 + $0x24] sm:$0xf]
        %v2172 = vld [vmem:[%s2161 + $0x28] sm:$0xf]
        %v2173 = vld [vmem:[%s2161 + $0x2c] sm:$0xf]
        %v2174 = vld [vmem:[%s2161 + $0x30] sm:$0xf]
        %v2175 = vld [vmem:[%s2161 + $0x34] sm:$0xf]
        %v2176 = vld [vmem:[%s2161 + $0x38] sm:$0xf]
        %v2177 = vld [vmem:[%s2161 + $0x3c] sm:$0xf]
        %v2196 = vunpack.c.l.b16 %v2126
        %v2197 = vunpack.c.l.b16 %v2127
        %v2198 = vunpack.c.l.b16 %v2128
        %v2199 = vunpack.c.l.b16 %v2129
        %v2200 = vunpack.c.l.b16 %v2130
        %v2201 = vunpack.c.l.b16 %v2131
        %v2202 = vunpack.c.l.b16 %v2132
        %v2203 = vunpack.c.l.b16 %v2133
        %v2204 = vunpack.c.l.b16 %v2134
        %v2205 = vunpack.c.l.b16 %v2135
        %v2206 = vunpack.c.l.b16 %v2136
        %v2207 = vunpack.c.l.b16 %v2137
        %v2208 = vunpack.c.l.b16 %v2138
        %v2209 = vunpack.c.l.b16 %v2139
        %v2210 = vunpack.c.l.b16 %v2140
        %v2211 = vunpack.c.l.b16 %v2141
        %v2212 = vunpack.c.l.b16 %v2142
        %v2213 = vunpack.c.l.b16 %v2160
        %v2214 = vpack.c.b16 %v2197, %v2196
        %v2215 = vpack.c.b16 %v2199, %v2198
        %v2216 = vpack.c.b16 %v2201, %v2200
        %v2217 = vpack.c.b16 %v2203, %v2202
        %v2218 = vpack.c.b16 %v2205, %v2204
        %v2219 = vpack.c.b16 %v2207, %v2206
        %v2220 = vpack.c.b16 %v2209, %v2208
        %v2221 = vpack.c.b16 %v2211, %v2210
        %v2222 = vpack.c.b16 %v2213, %v2212
        %v2224 = vshrl.u32 %v2214, 16
        %v2226 = vshll.u32 %v2214, 16
        %v2228 = vrot.slane %v2226, 1
        %v2229 = vor.u32 %v2224, %v2228
        %v2231 = vshll.u32 %v2215, 16
        %v2233 = vrot.slane %v2231, 1
        %v2234 = vsel %vm1332, %v2229, %v2233
        %v2235 = vshrl.u32 %v2215, 16
        %v2237 = vor.u32 %v2235, %v2233
        %v2239 = vshll.u32 %v2216, 16
        %v2241 = vrot.slane %v2239, 1
        %v2242 = vsel %vm1332, %v2237, %v2241
        %v2243 = vshrl.u32 %v2216, 16
        %v2245 = vor.u32 %v2243, %v2241
        %v2247 = vshll.u32 %v2217, 16
        %v2249 = vrot.slane %v2247, 1
        %v2250 = vsel %vm1332, %v2245, %v2249
        %v2251 = vshrl.u32 %v2217, 16
        %v2253 = vor.u32 %v2251, %v2249
        %v2255 = vshll.u32 %v2218, 16
        %v2257 = vrot.slane %v2255, 1
        %v2258 = vsel %vm1332, %v2253, %v2257
        %v2259 = vshrl.u32 %v2218, 16
        %v2261 = vor.u32 %v2259, %v2257
        %v2263 = vshll.u32 %v2219, 16
        %v2265 = vrot.slane %v2263, 1
        %v2266 = vsel %vm1332, %v2261, %v2265
        %v2267 = vshrl.u32 %v2219, 16
        %v2269 = vor.u32 %v2267, %v2265
        %v2271 = vshll.u32 %v2220, 16
        %v2273 = vrot.slane %v2271, 1
        %v2274 = vsel %vm1332, %v2269, %v2273
        %v2275 = vshrl.u32 %v2220, 16
        %v2277 = vor.u32 %v2275, %v2273
        %v2279 = vshll.u32 %v2221, 16
        %v2281 = vrot.slane %v2279, 1
        %v2282 = vsel %vm1332, %v2277, %v2281
        %v2283 = vshrl.u32 %v2221, 16
        %v2285 = vor.u32 %v2283, %v2281
        %v2287 = vshll.u32 %v2222, 16
        %v2289 = vrot.slane %v2287, 1
        %v2290 = vsel %vm1332, %v2285, %v2289
        %v2291 = vshrl.u32 %v2222, 16
        %v2293 = vor.u32 %v2291, %v2289
        %v2319 = vunpack.c.l.b16 %v2162
        %v2320 = vunpack.c.l.b16 %v2163
        %v2321 = vunpack.c.l.b16 %v2164
        %v2322 = vunpack.c.l.b16 %v2165
        %v2323 = vunpack.c.l.b16 %v2166
        %v2324 = vunpack.c.l.b16 %v2167
        %v2325 = vunpack.c.l.b16 %v2168
        %v2326 = vunpack.c.l.b16 %v2169
        %v2327 = vunpack.c.l.b16 %v2170
        %v2328 = vunpack.c.l.b16 %v2171
        %v2329 = vunpack.c.l.b16 %v2172
        %v2330 = vunpack.c.l.b16 %v2173
        %v2331 = vunpack.c.l.b16 %v2174
        %v2332 = vunpack.c.l.b16 %v2175
        %v2333 = vunpack.c.l.b16 %v2176
        %v2334 = vunpack.c.l.b16 %v2177
        %v2335 = vpack.c.b16 %v2320, %v2319
        %v2336 = vpack.c.b16 %v2322, %v2321
        %v2337 = vpack.c.b16 %v2324, %v2323
        %v2338 = vpack.c.b16 %v2326, %v2325
        %v2339 = vpack.c.b16 %v2328, %v2327
        %v2340 = vpack.c.b16 %v2330, %v2329
        %v2341 = vpack.c.b16 %v2332, %v2331
        %v2342 = vpack.c.b16 %v2334, %v2333
        %2351 = vmatpush.bf16.msra.mxu0 %v2342
        %2352 = vmatpush.bf16.msra.mxu0 %v2341
        %2353 = vmatpush.bf16.msra.mxu0 %v2340
        %2354 = vmatpush.bf16.msra.mxu0 %v2339
        %2355 = vmatpush.bf16.msra.mxu0 %v2338
        %2356 = vmatpush.bf16.msra.mxu0 %v2337
        %2357 = vmatpush.bf16.msra.mxu0 %v2336
        %2358 = vmatpush.bf16.msra.mxu0 %v2335
        %2359 = vmatmul.bf16.gmra.mxu0 %v2234
        %v2360 = vpop.f32.mrf.mxu0
        %v2361 = vadd.f32 0.0, %v2360
        %v2362 = vpop.f32.mrf.mxu0
        %v2363 = vadd.f32 0.0, %v2362
        %2364 = vmatmul.bf16.gmra.mxu0 %v2242
        %v2365 = vpop.f32.mrf.mxu0
        %v2366 = vadd.f32 0.0, %v2365
        %v2367 = vpop.f32.mrf.mxu0
        %v2368 = vadd.f32 0.0, %v2367
        %2369 = vmatmul.bf16.gmra.mxu0 %v2250
        %v2370 = vpop.f32.mrf.mxu0
        %v2371 = vadd.f32 0.0, %v2370
        %v2372 = vpop.f32.mrf.mxu0
        %v2373 = vadd.f32 0.0, %v2372
        %2374 = vmatmul.bf16.gmra.mxu0 %v2258
        %v2375 = vpop.f32.mrf.mxu0
        %v2376 = vadd.f32 0.0, %v2375
        %v2377 = vpop.f32.mrf.mxu0
        %v2378 = vadd.f32 0.0, %v2377
        %2379 = vmatmul.bf16.gmra.mxu0 %v2266
        %v2380 = vpop.f32.mrf.mxu0
        %v2381 = vadd.f32 0.0, %v2380
        %v2382 = vpop.f32.mrf.mxu0
        %v2383 = vadd.f32 0.0, %v2382
        %2384 = vmatmul.bf16.gmra.mxu0 %v2274
        %v2385 = vpop.f32.mrf.mxu0
        %v2386 = vadd.f32 0.0, %v2385
        %v2387 = vpop.f32.mrf.mxu0
        %v2388 = vadd.f32 0.0, %v2387
        %2389 = vmatmul.bf16.gmra.mxu0 %v2282
        %v2390 = vpop.f32.mrf.mxu0
        %v2391 = vadd.f32 0.0, %v2390
        %v2392 = vpop.f32.mrf.mxu0
        %v2393 = vadd.f32 0.0, %v2392
        %2394 = vmatmul.bf16.gmra.mxu0 %v2290
        %v2395 = vpop.f32.mrf.mxu0
        %v2396 = vadd.f32 0.0, %v2395
        %v2397 = vpop.f32.mrf.mxu0
        %v2398 = vadd.f32 0.0, %v2397
        %2399 = vmatmul.bf16.gmra.mxu0 %v2293
        %v2400 = vpop.f32.mrf.mxu0
        %v2401 = vadd.f32 0.0, %v2400
        %v2402 = vpop.f32.mrf.mxu0
        %v2403 = vadd.f32 0.0, %v2402
        %2404 = vdwg.mxu0
        %v2406 = vunpack.c.l.b16 %v2143
        %v2407 = vpack.c.b16 %v2406, %v2212
        %v2433 = vunpack.c.l.b16 %v2144
        %v2434 = vunpack.c.l.b16 %v2145
        %v2435 = vunpack.c.l.b16 %v2146
        %v2436 = vunpack.c.l.b16 %v2147
        %v2437 = vunpack.c.l.b16 %v2148
        %v2438 = vunpack.c.l.b16 %v2149
        %v2439 = vunpack.c.l.b16 %v2150
        %v2440 = vunpack.c.l.b16 %v2151
        %v2441 = vunpack.c.l.b16 %v2152
        %v2442 = vunpack.c.l.b16 %v2153
        %v2443 = vunpack.c.l.b16 %v2154
        %v2444 = vunpack.c.l.b16 %v2155
        %v2445 = vunpack.c.l.b16 %v2156
        %v2446 = vunpack.c.l.b16 %v2157
        %v2447 = vunpack.c.l.b16 %v2158
        %v2448 = vunpack.c.l.b16 %v2159
        %v2449 = vpack.c.b16 %v2434, %v2433
        %v2450 = vpack.c.b16 %v2436, %v2435
        %v2451 = vpack.c.b16 %v2438, %v2437
        %v2452 = vpack.c.b16 %v2440, %v2439
        %v2453 = vpack.c.b16 %v2442, %v2441
        %v2454 = vpack.c.b16 %v2444, %v2443
        %v2455 = vpack.c.b16 %v2446, %v2445
        %v2456 = vpack.c.b16 %v2448, %v2447
        %2465 = vmatpush.bf16.msra.mxu0 %v2456
        %2466 = vmatpush.bf16.msra.mxu0 %v2455
        %2467 = vmatpush.bf16.msra.mxu0 %v2454
        %2468 = vmatpush.bf16.msra.mxu0 %v2453
        %2469 = vmatpush.bf16.msra.mxu0 %v2452
        %2470 = vmatpush.bf16.msra.mxu0 %v2451
        %2471 = vmatpush.bf16.msra.mxu0 %v2450
        %2472 = vmatpush.bf16.msra.mxu0 %v2449
        %2473 = vmatmul.bf16.gmra.mxu0 %v2214
        %v2474 = vpop.f32.mrf.mxu0
        %v2475 = vadd.f32 %v2361, %v2474
        %v2476 = vpop.f32.mrf.mxu0
        %v2477 = vadd.f32 %v2363, %v2476
        %2478 = vmatmul.bf16.gmra.mxu0 %v2215
        %v2479 = vpop.f32.mrf.mxu0
        %v2480 = vadd.f32 %v2366, %v2479
        %v2481 = vpop.f32.mrf.mxu0
        %v2482 = vadd.f32 %v2368, %v2481
        %2483 = vmatmul.bf16.gmra.mxu0 %v2216
        %v2484 = vpop.f32.mrf.mxu0
        %v2485 = vadd.f32 %v2371, %v2484
        %v2486 = vpop.f32.mrf.mxu0
        %v2487 = vadd.f32 %v2373, %v2486
        %2488 = vmatmul.bf16.gmra.mxu0 %v2217
        %v2489 = vpop.f32.mrf.mxu0
        %v2490 = vadd.f32 %v2376, %v2489
        %v2491 = vpop.f32.mrf.mxu0
        %v2492 = vadd.f32 %v2378, %v2491
        %2493 = vmatmul.bf16.gmra.mxu0 %v2218
        %v2494 = vpop.f32.mrf.mxu0
        %v2495 = vadd.f32 %v2381, %v2494
        %v2496 = vpop.f32.mrf.mxu0
        %v2497 = vadd.f32 %v2383, %v2496
        %2498 = vmatmul.bf16.gmra.mxu0 %v2219
        %v2499 = vpop.f32.mrf.mxu0
        %v2500 = vadd.f32 %v2386, %v2499
        %v2501 = vpop.f32.mrf.mxu0
        %v2502 = vadd.f32 %v2388, %v2501
        %2503 = vmatmul.bf16.gmra.mxu0 %v2220
        %v2504 = vpop.f32.mrf.mxu0
        %v2505 = vadd.f32 %v2391, %v2504
        %v2506 = vpop.f32.mrf.mxu0
        %v2507 = vadd.f32 %v2393, %v2506
        %2508 = vmatmul.bf16.gmra.mxu0 %v2221
        %v2509 = vpop.f32.mrf.mxu0
        %v2510 = vadd.f32 %v2396, %v2509
        %v2511 = vpop.f32.mrf.mxu0
        %v2512 = vadd.f32 %v2398, %v2511
        %2513 = vmatmul.bf16.gmra.mxu0 %v2407
        %v2514 = vpop.f32.mrf.mxu0
        %v2515 = vadd.f32 %v2401, %v2514
        %v2516 = vpop.f32.mrf.mxu0
        %v2517 = vadd.f32 %v2403, %v2516
        %2518 = vdwg.mxu0
        %v2519 = vld [vmem:[#allocation2] sm:$0xe]
        %s2520 = scalar_lea.vmem [#allocation8], 128
        %v2521 = vld [vmem:[%s2520] sm:$0xf]
        %v2522 = vld [vmem:[%s2520 + $0x4] sm:$0xf]
        %v2523 = vld [vmem:[%s2520 + $0x8] sm:$0xf]
        %v2524 = vld [vmem:[%s2520 + $0xc] sm:$0xf]
        %v2525 = vld [vmem:[%s2520 + $0x10] sm:$0xf]
        %v2526 = vld [vmem:[%s2520 + $0x14] sm:$0xf]
        %v2527 = vld [vmem:[%s2520 + $0x18] sm:$0xf]
        %v2528 = vld [vmem:[%s2520 + $0x1c] sm:$0xf]
        %v2529 = vld [vmem:[%s2520 + $0x20] sm:$0xf]
        %v2530 = vld [vmem:[%s2520 + $0x24] sm:$0xf]
        %v2531 = vld [vmem:[%s2520 + $0x28] sm:$0xf]
        %v2532 = vld [vmem:[%s2520 + $0x2c] sm:$0xf]
        %v2533 = vld [vmem:[%s2520 + $0x30] sm:$0xf]
        %v2534 = vld [vmem:[%s2520 + $0x34] sm:$0xf]
        %v2535 = vld [vmem:[%s2520 + $0x38] sm:$0xf]
        %v2536 = vld [vmem:[%s2520 + $0x3c] sm:$0xf]
        %v2538 = vunpack.c.l.b16 %v2519
        %v2539 = vpack.c.b16 %v2197, %v2538
        %v2540 = vrot.slane %v2539, 1
        %v2541 = vrot.slane %v2215, 1
        %v2542 = vsel %vm1650, %v2540, %v2541
        %v2543 = vrot.slane %v2216, 1
        %v2544 = vsel %vm1650, %v2541, %v2543
        %v2545 = vrot.slane %v2217, 1
        %v2546 = vsel %vm1650, %v2543, %v2545
        %v2547 = vrot.slane %v2218, 1
        %v2548 = vsel %vm1650, %v2545, %v2547
        %v2549 = vrot.slane %v2219, 1
        %v2550 = vsel %vm1650, %v2547, %v2549
        %v2551 = vrot.slane %v2220, 1
        %v2552 = vsel %vm1650, %v2549, %v2551
        %v2553 = vrot.slane %v2221, 1
        %v2554 = vsel %vm1650, %v2551, %v2553
        %v2555 = vrot.slane %v2222, 1
        %v2556 = vsel %vm1650, %v2553, %v2555
        %v2582 = vunpack.c.l.b16 %v2521
        %v2583 = vunpack.c.l.b16 %v2522
        %v2584 = vunpack.c.l.b16 %v2523
        %v2585 = vunpack.c.l.b16 %v2524
        %v2586 = vunpack.c.l.b16 %v2525
        %v2587 = vunpack.c.l.b16 %v2526
        %v2588 = vunpack.c.l.b16 %v2527
        %v2589 = vunpack.c.l.b16 %v2528
        %v2590 = vunpack.c.l.b16 %v2529
        %v2591 = vunpack.c.l.b16 %v2530
        %v2592 = vunpack.c.l.b16 %v2531
        %v2593 = vunpack.c.l.b16 %v2532
        %v2594 = vunpack.c.l.b16 %v2533
        %v2595 = vunpack.c.l.b16 %v2534
        %v2596 = vunpack.c.l.b16 %v2535
        %v2597 = vunpack.c.l.b16 %v2536
        %v2598 = vpack.c.b16 %v2583, %v2582
        %v2599 = vpack.c.b16 %v2585, %v2584
        %v2600 = vpack.c.b16 %v2587, %v2586
        %v2601 = vpack.c.b16 %v2589, %v2588
        %v2602 = vpack.c.b16 %v2591, %v2590
        %v2603 = vpack.c.b16 %v2593, %v2592
        %v2604 = vpack.c.b16 %v2595, %v2594
        %v2605 = vpack.c.b16 %v2597, %v2596
        %2614 = vmatpush.bf16.msra.mxu0 %v2605
        %2615 = vmatpush.bf16.msra.mxu0 %v2604
        %2616 = vmatpush.bf16.msra.mxu0 %v2603
        %2617 = vmatpush.bf16.msra.mxu0 %v2602
        %2618 = vmatpush.bf16.msra.mxu0 %v2601
        %2619 = vmatpush.bf16.msra.mxu0 %v2600
        %2620 = vmatpush.bf16.msra.mxu0 %v2599
        %2621 = vmatpush.bf16.msra.mxu0 %v2598
        %2622 = vmatmul.bf16.gmra.mxu0 %v2542
        %v2623 = vpop.f32.mrf.mxu0
        %v2624 = vadd.f32 0.0, %v2623
        %v2625 = vpop.f32.mrf.mxu0
        %v2626 = vadd.f32 0.0, %v2625
        %2627 = vmatmul.bf16.gmra.mxu0 %v2544
        %v2628 = vpop.f32.mrf.mxu0
        %v2629 = vadd.f32 0.0, %v2628
        %v2630 = vpop.f32.mrf.mxu0
        %v2631 = vadd.f32 0.0, %v2630
        %2632 = vmatmul.bf16.gmra.mxu0 %v2546
        %v2633 = vpop.f32.mrf.mxu0
        %v2634 = vadd.f32 0.0, %v2633
        %v2635 = vpop.f32.mrf.mxu0
        %v2636 = vadd.f32 0.0, %v2635
        %2637 = vmatmul.bf16.gmra.mxu0 %v2548
        %v2638 = vpop.f32.mrf.mxu0
        %v2639 = vadd.f32 0.0, %v2638
        %v2640 = vpop.f32.mrf.mxu0
        %v2641 = vadd.f32 0.0, %v2640
        %2642 = vmatmul.bf16.gmra.mxu0 %v2550
        %v2643 = vpop.f32.mrf.mxu0
        %v2644 = vadd.f32 0.0, %v2643
        %v2645 = vpop.f32.mrf.mxu0
        %v2646 = vadd.f32 0.0, %v2645
        %2647 = vmatmul.bf16.gmra.mxu0 %v2552
        %v2648 = vpop.f32.mrf.mxu0
        %v2649 = vadd.f32 0.0, %v2648
        %v2650 = vpop.f32.mrf.mxu0
        %v2651 = vadd.f32 0.0, %v2650
        %2652 = vmatmul.bf16.gmra.mxu0 %v2554
        %v2653 = vpop.f32.mrf.mxu0
        %v2654 = vadd.f32 0.0, %v2653
        %v2655 = vpop.f32.mrf.mxu0
        %v2656 = vadd.f32 0.0, %v2655
        %2657 = vmatmul.bf16.gmra.mxu0 %v2556
        %v2658 = vpop.f32.mrf.mxu0
        %v2659 = vadd.f32 0.0, %v2658
        %v2660 = vpop.f32.mrf.mxu0
        %v2661 = vadd.f32 0.0, %v2660
        %2662 = vmatmul.bf16.gmra.mxu0 %v2555
        %v2663 = vpop.f32.mrf.mxu0
        %v2664 = vadd.f32 0.0, %v2663
        %v2665 = vpop.f32.mrf.mxu0
        %v2666 = vadd.f32 0.0, %v2665
        %2667 = vdwg.mxu0
        %v2668 = vadd.f32 %v2475, %v2624
        %v2669 = vadd.f32 %v2477, %v2626
        %v2670 = vadd.f32 %v2480, %v2629
        %v2671 = vadd.f32 %v2482, %v2631
        %v2672 = vadd.f32 %v2485, %v2634
        %v2673 = vadd.f32 %v2487, %v2636
        %v2674 = vadd.f32 %v2490, %v2639
        %v2675 = vadd.f32 %v2492, %v2641
        %v2676 = vadd.f32 %v2495, %v2644
        %v2677 = vadd.f32 %v2497, %v2646
        %v2678 = vadd.f32 %v2500, %v2649
        %v2679 = vadd.f32 %v2502, %v2651
        %v2680 = vadd.f32 %v2505, %v2654
        %v2681 = vadd.f32 %v2507, %v2656
        %v2682 = vadd.f32 %v2510, %v2659
        %v2683 = vadd.f32 %v2512, %v2661
        %v2684 = vadd.f32 %v2515, %v2664
        %v2685 = vadd.f32 %v2517, %v2666
        %v2686 = vld [vmem:[#allocation9 + $0x2] sm:$0x1]
        %v2687 = vperm.slane %v2686, 0
        %v2688 = vmul.f32 %v2668, %v2687
        %v2689 = vmul.f32 %v2669, %v2687
        %v2690 = vmul.f32 %v2670, %v2687
        %v2691 = vmul.f32 %v2671, %v2687
        %v2692 = vmul.f32 %v2672, %v2687
        %v2693 = vmul.f32 %v2673, %v2687
        %v2694 = vmul.f32 %v2674, %v2687
        %v2695 = vmul.f32 %v2675, %v2687
        %v2696 = vmul.f32 %v2676, %v2687
        %v2697 = vmul.f32 %v2677, %v2687
        %v2698 = vmul.f32 %v2678, %v2687
        %v2699 = vmul.f32 %v2679, %v2687
        %v2700 = vmul.f32 %v2680, %v2687
        %v2701 = vmul.f32 %v2681, %v2687
        %v2702 = vmul.f32 %v2682, %v2687
        %v2703 = vmul.f32 %v2683, %v2687
        %v2704 = vmul.f32 %v2684, %v2687
        %v2705 = vmul.f32 %v2685, %v2687
        %v2706 = vld [vmem:[#allocation9 + $0x3] sm:$0x1]
        %v2707 = vperm.slane %v2706, 0
        %v2708 = vadd.f32 %v2688, %v2707
        %v2709 = vadd.f32 %v2689, %v2707
        %v2710 = vadd.f32 %v2690, %v2707
        %v2711 = vadd.f32 %v2691, %v2707
        %v2712 = vadd.f32 %v2692, %v2707
        %v2713 = vadd.f32 %v2693, %v2707
        %v2714 = vadd.f32 %v2694, %v2707
        %v2715 = vadd.f32 %v2695, %v2707
        %v2716 = vadd.f32 %v2696, %v2707
        %v2717 = vadd.f32 %v2697, %v2707
        %v2718 = vadd.f32 %v2698, %v2707
        %v2719 = vadd.f32 %v2699, %v2707
        %v2720 = vadd.f32 %v2700, %v2707
        %v2721 = vadd.f32 %v2701, %v2707
        %v2722 = vadd.f32 %v2702, %v2707
        %v2723 = vadd.f32 %v2703, %v2707
        %v2724 = vadd.f32 %v2704, %v2707
        %v2725 = vadd.f32 %v2705, %v2707
        %v2726 = vld [vmem:[%s226] sm:$0xff]
        %v2727 = vld [vmem:[%s226 + $0x8] sm:$0xff]
        %v2728 = vadd.f32 %v2708, %v2726
        %v2729 = vadd.f32 %v2709, %v2727
        %v2730 = vmax.f32 %v2728, 0.0
        %v2731 = vmax.f32 %v2729, 0.0
        %2732 = vst [vmem:[%s266] sm:$0xff] %v2730
        %2733 = vst [vmem:[%s266 + $0x8] sm:$0xff] %v2731
        %v2734 = vld [vmem:[%s327] sm:$0xff]
        %v2735 = vld [vmem:[%s327 + $0x8] sm:$0xff]
        %vm2738 = vcmask 1041408
        %v2739 = vrot.slane %v2734, 6
        %v2740 = vrot.slane %v2735, 6
        %v2741 = vsel %vm2738, %v2739, %v2740
        %v2745 = vadd.f32 %v2710, %v2739
        %v2746 = vadd.f32 %v2711, %v2741
        %v2747 = vadd.f32 %v2712, %v2740
        %v2748 = vmax.f32 %v2745, 0.0
        %v2749 = vmax.f32 %v2746, 0.0
        %v2750 = vmax.f32 %v2747, 0.0
        %s2751 = scalar_lea.vmem %s266, 16 [#allocation11]
        %2752 = vst [vmem:[%s2751 - $0x2] sm:$0xfc] %v2748
        %2753 = vst [vmem:[%s2751 + $0x6] sm:$0xff] %v2749
        %2754 = vst [vmem:[%s2751 + $0xe] sm:$0x3] %v2750
        %v2755 = vld [vmem:[%s369] sm:$0xff]
        %v2756 = vld [vmem:[%s369 + $0x8] sm:$0xff]
        %vm2759 = vcmask 1043456
        %v2760 = vrot.slane %v2755, 4
        %v2761 = vrot.slane %v2756, 4
        %v2762 = vsel %vm2759, %v2760, %v2761
        %v2766 = vadd.f32 %v2712, %v2760
        %v2767 = vadd.f32 %v2713, %v2762
        %v2768 = vadd.f32 %v2714, %v2761
        %v2769 = vmax.f32 %v2766, 0.0
        %v2770 = vmax.f32 %v2767, 0.0
        %v2771 = vmax.f32 %v2768, 0.0
        %s2772 = scalar_lea.vmem %s266, 32 [#allocation11]
        %2773 = vst [vmem:[%s2772 - $0x4] sm:$0xf0] %v2769
        %2774 = vst [vmem:[%s2772 + $0x4] sm:$0xff] %v2770
        %2775 = vst [vmem:[%s2772 + $0xc] sm:$0xf] %v2771
        %v2776 = vld [vmem:[%s411] sm:$0xff]
        %v2777 = vld [vmem:[%s411 + $0x8] sm:$0xff]
        %vm2780 = vcmask 1045504
        %v2781 = vrot.slane %v2776, 2
        %v2782 = vrot.slane %v2777, 2
        %v2783 = vsel %vm2780, %v2781, %v2782
        %v2787 = vadd.f32 %v2714, %v2781
        %v2788 = vadd.f32 %v2715, %v2783
        %v2789 = vadd.f32 %v2716, %v2782
        %v2790 = vmax.f32 %v2787, 0.0
        %v2791 = vmax.f32 %v2788, 0.0
        %v2792 = vmax.f32 %v2789, 0.0
        %s2793 = scalar_lea.vmem %s266, 48 [#allocation11]
        %2794 = vst [vmem:[%s2793 - $0x6] sm:$0xc0] %v2790
        %2795 = vst [vmem:[%s2793 + $0x2] sm:$0xff] %v2791
        %2796 = vst [vmem:[%s2793 + $0xa] sm:$0x3f] %v2792
        %v2797 = vld [vmem:[%s452] sm:$0xff]
        %v2798 = vld [vmem:[%s452 + $0x8] sm:$0xff]
        %v2799 = vadd.f32 %v2717, %v2797
        %v2800 = vadd.f32 %v2718, %v2798
        %v2801 = vmax.f32 %v2799, 0.0
        %v2802 = vmax.f32 %v2800, 0.0
        %s2803 = scalar_lea.vmem %s266, 64 [#allocation11]
        %2804 = vst [vmem:[%s2803] sm:$0xff] %v2801
        %2805 = vst [vmem:[%s2803 + $0x8] sm:$0xff] %v2802
        %v2806 = vld [vmem:[%s484] sm:$0xff]
        %v2807 = vld [vmem:[%s484 + $0x8] sm:$0xff]
        %v2810 = vrot.slane %v2806, 6
        %v2811 = vrot.slane %v2807, 6
        %v2812 = vsel %vm2738, %v2810, %v2811
        %v2816 = vadd.f32 %v2719, %v2810
        %v2817 = vadd.f32 %v2720, %v2812
        %v2818 = vadd.f32 %v2721, %v2811
        %v2819 = vmax.f32 %v2816, 0.0
        %v2820 = vmax.f32 %v2817, 0.0
        %v2821 = vmax.f32 %v2818, 0.0
        %s2822 = scalar_lea.vmem %s266, 80 [#allocation11]
        %2823 = vst [vmem:[%s2822 - $0x2] sm:$0xfc] %v2819
        %2824 = vst [vmem:[%s2822 + $0x6] sm:$0xff] %v2820
        %2825 = vst [vmem:[%s2822 + $0xe] sm:$0x3] %v2821
        %v2826 = vld [vmem:[%s518] sm:$0xff]
        %v2827 = vld [vmem:[%s518 + $0x8] sm:$0xff]
        %v2830 = vrot.slane %v2826, 4
        %v2831 = vrot.slane %v2827, 4
        %v2832 = vsel %vm2759, %v2830, %v2831
        %v2836 = vadd.f32 %v2721, %v2830
        %v2837 = vadd.f32 %v2722, %v2832
        %v2838 = vadd.f32 %v2723, %v2831
        %v2839 = vmax.f32 %v2836, 0.0
        %v2840 = vmax.f32 %v2837, 0.0
        %v2841 = vmax.f32 %v2838, 0.0
        %s2842 = scalar_lea.vmem %s266, 96 [#allocation11]
        %2843 = vst [vmem:[%s2842 - $0x4] sm:$0xf0] %v2839
        %2844 = vst [vmem:[%s2842 + $0x4] sm:$0xff] %v2840
        %2845 = vst [vmem:[%s2842 + $0xc] sm:$0xf] %v2841
        %v2846 = vld [vmem:[%s552] sm:$0xff]
        %v2847 = vld [vmem:[%s552 + $0x8] sm:$0xff]
        %v2850 = vrot.slane %v2846, 2
        %v2851 = vrot.slane %v2847, 2
        %v2852 = vsel %vm2780, %v2850, %v2851
        %v2856 = vadd.f32 %v2723, %v2850
        %v2857 = vadd.f32 %v2724, %v2852
        %v2858 = vadd.f32 %v2725, %v2851
        %v2859 = vmax.f32 %v2856, 0.0
        %v2860 = vmax.f32 %v2857, 0.0
        %v2861 = vmax.f32 %v2858, 0.0
        %s2862 = scalar_lea.vmem %s266, 112 [#allocation11]
        %2863 = vst [vmem:[%s2862 - $0x6] sm:$0xc0] %v2859
        %2864 = vst [vmem:[%s2862 + $0x2] sm:$0xff] %v2860
        %2865 = vst [vmem:[%s2862 + $0xa] sm:$0x3f] %v2861
        %s2866 = sand.u32 %s120, 1
        %s2867 = scalar_lea.sflag [#allocation5], %s2866
        %s2868 = sand.u32 %s120, 1
        %s2869 = smul.addr %s2868, 128
        %s2870 = scalar_lea.vmem [#allocation11], %s2869
        // Predicated region
        $region53: #{tpu_custom_call.1} parent=35 // pred_check
          %p2871 = pneg %p130
        $region54: #{tpu_custom_call.1} parent=35 // pred_check_branch
          %2873 = sbr.rel (%p2871) target = $region56
        $region55: #{tpu_custom_call.1} parent=35 // pred_region
          %s2874 = smul.u32 8, %s23
          %2876 = vsyncadd %s2867, 0
          %s2877 = smul.addr %s2874, 2
          %s2878 = smul.addr %s2877, 8
          %s2879 = scalar_lea.hbm %s4, %s2878
          %s2880 = sshll.u32 %s2870, 4
          %s2881 = int_to_ptr.vmem [resolvable:$true] %s2880
          %s2882 = sshll.u32 %s2879, 4
          %s2883 = int_to_ptr.hbm [resolvable:$true] %s2882
          %2888 = dma.vmem_to_hbm [thread:$0]  %s2881, 2048, %s2883, %s2867, 128, 128, 8
        $region56: #{tpu_custom_call.1} parent=35 // pred_fallthru
          _
      $region36: #{tpu_custom_call.1} parent=5 // pred_fallthru
        _
      %p2889 = scmp.le.s32.totalorder 2, %s18
      // Predicated region
      $region57: #{tpu_custom_call.1} parent=5 // pred_check
        %p2890 = pneg %p2889
      $region58: #{tpu_custom_call.1} parent=5 // pred_check_branch
        %2892 = sbr.rel (%p2890) target = $region60
      $region59: #{tpu_custom_call.1} parent=5 // pred_region
        %s2893 = ssub.s32 %s18, 2
        // Predicated region
        $region61: #{tpu_custom_call.1} parent=59 // pred_check
          %p2894 = pneg %p136
        $region62: #{tpu_custom_call.1} parent=59 // pred_check_branch
          %2896 = sbr.rel (%p2894) target = $region64
        $region63: #{tpu_custom_call.1} parent=59 // pred_region
          %s2897 = sand.u32 %s121, 1
          %s2898 = scalar_lea.sflag [#allocation5], %s2897
          %s2899 = sand.u32 %s121, 1
          %s2900 = smul.addr %s2899, 128
          %s2901 = scalar_lea.vmem [#allocation11], %s2900
          %2903 = dma.done %s2898, 2048
        $region64: #{tpu_custom_call.1} parent=59 // pred_fallthru
          _
      $region60: #{tpu_custom_call.1} parent=5 // pred_fallthru
        _
    $region6: #{tpu_custom_call.1} parent=1 // loop_footer
      %s22 = sadd.s32 1, %s18
    $region7: #{tpu_custom_call.1} parent=1 // loop_footer_branch
      %17 = sbr.rel target = $region3
    $region8: #{tpu_custom_call.1} parent=1 // loop_exit
      _
    %2904 = vsyncpa [#allocation4], 1
    %s2905 = scalar_lea.sflag [#allocation4], 1
    %2906 = vsyncpa %s2905, 1
    %2907 = vsyncpa [#allocation7], 1
    %2908 = vsyncpa [#allocation10], 1
    %2909 = vsyncpa [#allocation5], 1
    %s2910 = scalar_lea.sflag [#allocation5], 1
    %2911 = vsyncpa %s2910, 1

</llo_original>
